<compile_context>
chip_gen: v7x
topology: tpu7x:2x2x1
jax: 0.10.0
libtpu: 0.0.40
codegen_flags: <defaults>
</compile_context>

<pallas_src>
import math

import jax
import jax.numpy as jnp
from jax.experimental import pallas as pl
from jax.experimental.pallas import tpu as pltpu

IN_DIM = 4
OUT_DIM = 3
N_SINGLE = 3            # identity, sin, cos
N_DOUBLE = 1            # multiply
USE_BIAS = True
# nn.Linear input dim in the original module: [ones?] + singles + pairwise.
LIN_IN = (1 if USE_BIAS else 0) + N_SINGLE * IN_DIM + N_DOUBLE * IN_DIM * IN_DIM   # 29
NFEAT = N_SINGLE * IN_DIM + N_DOUBLE * IN_DIM * IN_DIM                              # 28 (ones folded into bias)
NFEAT_PAD = 32          # pad contraction dim to a multiple of 8 (aligned operand layout)

TILE_B = 1024           # batch tile; multiple of 128 => lane-dense vregs & stores.
                        # Footprint ~0.4 MiB/tile: far inside the 32 MiB scoped VMEM
                        # default on all generations (incl. v7x's 64 MiB physical VMEM).


def eql_kernel(x_ref, w_ref, b_ref, o_ref, f_ref):
    """One batch tile, feature-major / batch-on-lanes layout.

    x_ref: (IN_DIM, TILE_B)      input tile (batch on the 128-lane axis)
    w_ref: (OUT_DIM, NFEAT_PAD)  repacked weights (bias column removed, zero-padded)
    b_ref: (OUT_DIM, 1)          effective bias = bias + W[:, ones-column]
    o_ref: (OUT_DIM, TILE_B)     output tile
    f_ref: (NFEAT_PAD, TILE_B)   VMEM scratch: feature slab
    """
    x = x_ref[...]                                           # (IN_DIM, TILE_B) f32

    # Build the feature slab, batch dense on lanes.
    f_ref[0:IN_DIM, :] = x                                   # identity
    f_ref[IN_DIM:2 * IN_DIM, :] = jnp.sin(x)                 # sin
    f_ref[2 * IN_DIM:3 * IN_DIM, :] = jnp.cos(x)             # cos
    base = 3 * IN_DIM
    for i in range(IN_DIM):                                  # pairwise x_i * x_j, i-major
        f_ref[base + i * IN_DIM:base + (i + 1) * IN_DIM, :] = x[i:i + 1, :] * x
    # Zero the padding rows: their weight columns are zero, but 0 * uninitialized
    # VMEM could be NaN, so keep them clean (tiny store, every tile — scratch is
    # per-core and must not rely on a program_id==0 init under "parallel").
    f_ref[NFEAT:NFEAT_PAD, :] = jnp.zeros((NFEAT_PAD - NFEAT, x.shape[1]), jnp.float32)

    # Single fused contraction replacing the previous 8 tiny dots.
    o_ref[...] = jnp.dot(w_ref[...], f_ref[...],
                         preferred_element_type=jnp.float32) + b_ref[...]


def pack_params(w_torch, bias):
    """Repack nn.Linear params for the kernel (host-side, once).

    w_torch: (OUT_DIM, LIN_IN) as stored by nn.Linear.weight; bias: (OUT_DIM,).
    Returns (w_eff (OUT_DIM, NFEAT_PAD), b_eff (OUT_DIM, 1)).
    """
    w_torch = w_torch.astype(jnp.float32)
    bias = jnp.reshape(bias, (OUT_DIM,)).astype(jnp.float32)
    if USE_BIAS:
        b_eff = bias + w_torch[:, 0]         # fold the ones-feature column into the bias
        w_feat = w_torch[:, 1:]
    else:
        b_eff = bias
        w_feat = w_torch
    w_eff = jnp.zeros((OUT_DIM, NFEAT_PAD), jnp.float32).at[:, :NFEAT].set(w_feat)
    return w_eff, b_eff.reshape(OUT_DIM, 1)


def symbolic_net_forward(x, w_torch, bias, *, tile_b=TILE_B):
    """x: (B, IN_DIM); w_torch: (OUT_DIM, LIN_IN); bias: (OUT_DIM,). Returns (B, OUT_DIM)."""
    B = x.shape[0]
    n_tiles = max(1, (B + tile_b - 1) // tile_b)
    b_pad = n_tiles * tile_b

    # Lane-dense layout: batch on the last (lane) axis; zero-pad the tail tile
    # (sin(0)=0, cos(0)=1 — padded rows are harmless and discarded below).
    x_t = jnp.zeros((IN_DIM, b_pad), jnp.float32).at[:, :B].set(x.astype(jnp.float32).T)
    w_eff, b_eff = pack_params(w_torch, bias)

    cost = pl.CostEstimate(
        flops=2 * b_pad * NFEAT_PAD * OUT_DIM + b_pad * IN_DIM * IN_DIM,
        transcendentals=2 * b_pad * IN_DIM,
        bytes_accessed=4 * b_pad * (IN_DIM + OUT_DIM) + 4 * OUT_DIM * (NFEAT_PAD + 1),
    )

    out_t = pl.pallas_call(
        eql_kernel,
        out_shape=jax.ShapeDtypeStruct((OUT_DIM, b_pad), jnp.float32),
        grid_spec=pltpu.PrefetchScalarGridSpec(
            num_scalar_prefetch=0,
            grid=(n_tiles,),
            in_specs=[
                pl.BlockSpec((IN_DIM, tile_b), lambda i: (0, i)),       # x: tiled over batch
                pl.BlockSpec((OUT_DIM, NFEAT_PAD), lambda i: (0, 0)),   # weights: VMEM-resident
                pl.BlockSpec((OUT_DIM, 1), lambda i: (0, 0)),           # bias: VMEM-resident
            ],
            out_specs=pl.BlockSpec((OUT_DIM, tile_b), lambda i: (0, i)),
            scratch_shapes=[pltpu.VMEM((NFEAT_PAD, tile_b), jnp.float32)],
        ),
        compiler_params=pltpu.CompilerParams(
            dimension_semantics=("parallel",),
        ),
        cost_estimate=cost,
    )(x_t, w_eff, b_eff)

    return out_t[:, :B].T


def reference_forward(x, w_torch, bias):
    """Pure-JAX reference mirroring the PyTorch forward exactly."""
    B = x.shape[0]
    feats = [jnp.ones((B, 1), jnp.float32), x, jnp.sin(x), jnp.cos(x)]
    x_i = x[:, :, None]                                      # (B, D, 1)
    x_j = x[:, None, :]                                      # (B, 1, D)
    feats.append((x_i * x_j).reshape(B, -1))                 # (B, D*D), i-major
    f = jnp.concatenate(feats, axis=1)                       # (B, LIN_IN)
    return f @ w_torch.T + bias                              # nn.Linear: x @ W.T + b


if __name__ == "__main__":
    key = jax.random.PRNGKey(0)
    kx, kw, kb = jax.random.split(key, 3)

    B = 8
    x = jax.random.normal(kx, (B, IN_DIM), dtype=jnp.float32)

    # Deterministic nn.Linear-style init: U(-1/sqrt(fan_in), 1/sqrt(fan_in)).
    bound = 1.0 / math.sqrt(LIN_IN)
    w_torch = jax.random.uniform(kw, (OUT_DIM, LIN_IN), jnp.float32, -bound, bound)
    bias = jax.random.uniform(kb, (OUT_DIM,), jnp.float32, -bound, bound)

    out = symbolic_net_forward(x, w_torch, bias)
    out = jax.block_until_ready(out)

    ref = reference_forward(x, w_torch, bias)
    assert out.shape == (B, OUT_DIM)
    assert jnp.allclose(out, ref, atol=1e-5, rtol=1e-5), "mismatch vs reference"

    print("KERNEL_OK")
</pallas_src>

<mosaic_0001>
module attributes {stable_mosaic.version = 11 : i64} {
  func.func @eql_kernel(%arg0: i32, %arg1: memref<4x1024xf32, #tpu.memory_space<vmem>>, %arg2: memref<3x32xf32, #tpu.memory_space<vmem>>, %arg3: memref<3x1xf32, #tpu.memory_space<vmem>>, %arg4: memref<3x1024xf32, #tpu.memory_space<vmem>>, %arg5: memref<32x1024xf32, #tpu.memory_space<vmem>>) attributes {dimension_semantics = [#tpu.dimension_semantics<parallel>], iteration_bounds = array<i64: 1>, scalar_prefetch = 0 : i64, scratch_operands = 1 : i64, tpu.core_type = #tpu.core_type<tc>, window_params = [{transform_indices = @transform_0, window_bounds = array<i64: 4, 1024>}, {pipeline_mode = #tpu.pipeline_mode<synchronous>, transform_indices = @transform_1, window_bounds = array<i64: 3, 32>}, {pipeline_mode = #tpu.pipeline_mode<synchronous>, transform_indices = @transform_2, window_bounds = array<i64: 3, 1>}, {transform_indices = @transform_3, window_bounds = array<i64: 3, 1024>}]} {
    %c0 = arith.constant 0 : index
    %c0_0 = arith.constant 0 : index
    %0 = vector.load %arg1[%c0, %c0_0] : memref<4x1024xf32, #tpu.memory_space<vmem>>, vector<4x1024xf32>
    %c0_1 = arith.constant 0 : index
    %c0_2 = arith.constant 0 : index
    %1 = vector.load %arg5[%c0_1, %c0_2] : memref<32x1024xf32, #tpu.memory_space<vmem>>, vector<4x1024xf32>
    tpu.vector_store %arg5[%c0_1, %c0_2], %0 {strides = array<i32>} : memref<32x1024xf32, #tpu.memory_space<vmem>>, vector<4x1024xf32>,
    %2 = math.sin %0 : vector<4x1024xf32>
    %c4 = arith.constant 4 : index
    %c0_3 = arith.constant 0 : index
    %3 = vector.load %arg5[%c4, %c0_3] : memref<32x1024xf32, #tpu.memory_space<vmem>>, vector<4x1024xf32>
    tpu.vector_store %arg5[%c4, %c0_3], %2 {strides = array<i32>} : memref<32x1024xf32, #tpu.memory_space<vmem>>, vector<4x1024xf32>,
    %4 = math.cos %0 : vector<4x1024xf32>
    %c8 = arith.constant 8 : index
    %c0_4 = arith.constant 0 : index
    %5 = vector.load %arg5[%c8, %c0_4] : memref<32x1024xf32, #tpu.memory_space<vmem>>, vector<4x1024xf32>
    tpu.vector_store %arg5[%c8, %c0_4], %4 {strides = array<i32>} : memref<32x1024xf32, #tpu.memory_space<vmem>>, vector<4x1024xf32>,
    %6 = vector.extract_strided_slice %0 {offsets = [0, 0], sizes = [1, 1024], strides = [1, 1]} : vector<4x1024xf32> to vector<1x1024xf32>
    %7 = vector.broadcast %6 : vector<1x1024xf32> to vector<4x1024xf32>
    %8 = arith.mulf %7, %0 : vector<4x1024xf32>
    %c12 = arith.constant 12 : index
    %c0_5 = arith.constant 0 : index
    %9 = vector.load %arg5[%c12, %c0_5] : memref<32x1024xf32, #tpu.memory_space<vmem>>, vector<4x1024xf32>
    tpu.vector_store %arg5[%c12, %c0_5], %8 {strides = array<i32>} : memref<32x1024xf32, #tpu.memory_space<vmem>>, vector<4x1024xf32>,
    %10 = vector.extract_strided_slice %0 {offsets = [1, 0], sizes = [1, 1024], strides = [1, 1]} : vector<4x1024xf32> to vector<1x1024xf32>
    %11 = vector.broadcast %10 : vector<1x1024xf32> to vector<4x1024xf32>
    %12 = arith.mulf %11, %0 : vector<4x1024xf32>
    %c16 = arith.constant 16 : index
    %c0_6 = arith.constant 0 : index
    %13 = vector.load %arg5[%c16, %c0_6] : memref<32x1024xf32, #tpu.memory_space<vmem>>, vector<4x1024xf32>
    tpu.vector_store %arg5[%c16, %c0_6], %12 {strides = array<i32>} : memref<32x1024xf32, #tpu.memory_space<vmem>>, vector<4x1024xf32>,
    %14 = vector.extract_strided_slice %0 {offsets = [2, 0], sizes = [1, 1024], strides = [1, 1]} : vector<4x1024xf32> to vector<1x1024xf32>
    %15 = vector.broadcast %14 : vector<1x1024xf32> to vector<4x1024xf32>
    %16 = arith.mulf %15, %0 : vector<4x1024xf32>
    %c20 = arith.constant 20 : index
    %c0_7 = arith.constant 0 : index
    %17 = vector.load %arg5[%c20, %c0_7] : memref<32x1024xf32, #tpu.memory_space<vmem>>, vector<4x1024xf32>
    tpu.vector_store %arg5[%c20, %c0_7], %16 {strides = array<i32>} : memref<32x1024xf32, #tpu.memory_space<vmem>>, vector<4x1024xf32>,
    %18 = vector.extract_strided_slice %0 {offsets = [3, 0], sizes = [1, 1024], strides = [1, 1]} : vector<4x1024xf32> to vector<1x1024xf32>
    %19 = vector.broadcast %18 : vector<1x1024xf32> to vector<4x1024xf32>
    %20 = arith.mulf %19, %0 : vector<4x1024xf32>
    %c24 = arith.constant 24 : index
    %c0_8 = arith.constant 0 : index
    %21 = vector.load %arg5[%c24, %c0_8] : memref<32x1024xf32, #tpu.memory_space<vmem>>, vector<4x1024xf32>
    tpu.vector_store %arg5[%c24, %c0_8], %20 {strides = array<i32>} : memref<32x1024xf32, #tpu.memory_space<vmem>>, vector<4x1024xf32>,
    %cst = arith.constant 0.000000e+00 : f32
    %22 = vector.broadcast %cst : f32 to vector<4x1024xf32>
    %c28 = arith.constant 28 : index
    %c0_9 = arith.constant 0 : index
    %23 = vector.load %arg5[%c28, %c0_9] : memref<32x1024xf32, #tpu.memory_space<vmem>>, vector<4x1024xf32>
    tpu.vector_store %arg5[%c28, %c0_9], %22 {strides = array<i32>} : memref<32x1024xf32, #tpu.memory_space<vmem>>, vector<4x1024xf32>,
    %c0_10 = arith.constant 0 : index
    %c0_11 = arith.constant 0 : index
    %24 = vector.load %arg2[%c0_10, %c0_11] : memref<3x32xf32, #tpu.memory_space<vmem>>, vector<3x32xf32>
    %c0_12 = arith.constant 0 : index
    %c0_13 = arith.constant 0 : index
    %25 = vector.load %arg5[%c0_12, %c0_13] : memref<32x1024xf32, #tpu.memory_space<vmem>>, vector<32x1024xf32>
    %cst_14 = arith.constant dense<0.000000e+00> : vector<3x1024xf32>
    %26 = tpu.matmul %24, %25, %cst_14 {dimension_numbers = #tpu.dot_dimension_numbers<[1], [0], [0], [1], [0, 0, 1, 1], [], []>} : vector<3x32xf32>, vector<32x1024xf32>, vector<3x1024xf32> -> vector<3x1024xf32>
    %c0_15 = arith.constant 0 : index
    %c0_16 = arith.constant 0 : index
    %27 = vector.load %arg3[%c0_15, %c0_16] : memref<3x1xf32, #tpu.memory_space<vmem>>, vector<3x1xf32>
    %28 = vector.broadcast %27 : vector<3x1xf32> to vector<3x1024xf32>
    %29 = arith.addf %26, %28 : vector<3x1024xf32>
    %c0_17 = arith.constant 0 : index
    %c0_18 = arith.constant 0 : index
    %30 = vector.load %arg4[%c0_17, %c0_18] : memref<3x1024xf32, #tpu.memory_space<vmem>>, vector<3x1024xf32>
    tpu.vector_store %arg4[%c0_17, %c0_18], %29 {strides = array<i32>} : memref<3x1024xf32, #tpu.memory_space<vmem>>, vector<3x1024xf32>,
    return
  }
  func.func @transform_0(%arg0: i32) -> (i32, i32) {
    %c0_i32 = arith.constant 0 : i32
    %c0_i32_0 = arith.constant 0 : i32
    return %c0_i32, %arg0 : i32, i32
  }
  func.func @transform_1(%arg0: i32) -> (i32, i32) {
    %c0_i32 = arith.constant 0 : i32
    %c0_i32_0 = arith.constant 0 : i32
    %c0_i32_1 = arith.constant 0 : i32
    return %c0_i32, %c0_i32_0 : i32, i32
  }
  func.func @transform_2(%arg0: i32) -> (i32, i32) {
    %c0_i32 = arith.constant 0 : i32
    %c0_i32_0 = arith.constant 0 : i32
    %c0_i32_1 = arith.constant 0 : i32
    return %c0_i32, %c0_i32_0 : i32, i32
  }
  func.func @transform_3(%arg0: i32) -> (i32, i32) {
    %c0_i32 = arith.constant 0 : i32
    %c0_i32_0 = arith.constant 0 : i32
    return %c0_i32, %arg0 : i32, i32
  }
}

</mosaic_0001>

<llo_original>
// kernel: tpu_custom_call.1
$region0: #{tpu_custom_call.1}
  #allocation0 [shape = 'u32[]', space=smem, size = 0x4, offset = 0x4, fixed_abs, tag = 'smem constant byte address 0x4 - core index']
  #allocation1 [shape = 'u32[144,128]{1,0:T(1,128)}', space=vmem, size = 0x12000, scoped, tag = 'internal scratch']
  #allocation2 [shape = 'f32[32,1024]{1,0:T(8,128)}', space=vmem, size = 0x20000, scoped, tag = 'scratch operand']
  %s0 = inlined_call_operand.hbm [shape: f32[4,1024], index: 0, kind: input, shape index: {}]
  %s1 = inlined_call_operand.vmem [shape: f32[3,32], index: 1, kind: input, shape index: {}]
  %s2 = inlined_call_operand.vmem [shape: f32[3,1], index: 2, kind: input, shape index: {}]
  %s3 = inlined_call_operand.hbm [shape: f32[3,1024], index: 3, kind: output, shape index: {}]
  %s4 = sld [smem:[#allocation0]]
  $region26: #{tpu_custom_call.1} parent=0
    _
  %s6 = ssub.s32 1, %s4
  %s7 = scalar_select 0, %s6, %s4
  $region1: #{tpu_custom_call.1} parent=0
    #allocation3 [shape = 'u8[16384]{0}', space=vmem, size = 0x4000, scoped, tag = 'input window, operand 0, single buffered']
    #allocation4 [shape = 's32[1]{0}', space=sflag, size = 0x4, scoped, tag = 'scoped memory for tpu_custom_call.1']
    #allocation5 [shape = 's32[1]{0}', space=sflag, size = 0x4, scoped, tag = 'scoped memory for tpu_custom_call.1']
    #allocation6 [shape = 'u8[16384]{0}', space=vmem, size = 0x4000, scoped, tag = 'output window, operand 0, single buffered']
    %8 = vsyncpa [#allocation4], 0
    %9 = vsyncpa [#allocation5], 0
    // Predicated region
    $region2: #{tpu_custom_call.1} parent=1 // pred_check
      _
    $region3: #{tpu_custom_call.1} parent=1 // pred_check_branch
      %11 = sbr.rel (0) target = $region5
    $region4: #{tpu_custom_call.1} parent=1 // pred_region
      %s13 = ssub.s32 512, 512
      %14 = vsyncadd [#allocation4], %s13
      %s16 = sshll.u32 [#allocation3], 4
      %s17 = int_to_ptr.vmem [resolvable:$true] %s16
      %19 = dma.hbm_to_vmem [thread:$0]  %s0, 512, %s17, [#allocation4]
    $region5: #{tpu_custom_call.1} parent=1 // pred_fallthru
      _
    // Predicated region
    $region6: #{tpu_custom_call.1} parent=1 // pred_check
      _
    $region7: #{tpu_custom_call.1} parent=1 // pred_check_branch
      %21 = sbr.rel (0) target = $region9
    $region8: #{tpu_custom_call.1} parent=1 // pred_region
      _
    $region9: #{tpu_custom_call.1} parent=1 // pred_fallthru
      _
    // Predicated region
    $region10: #{tpu_custom_call.1} parent=1 // pred_check
      _
    $region11: #{tpu_custom_call.1} parent=1 // pred_check_branch
      %23 = sbr.rel (0) target = $region13
    $region12: #{tpu_custom_call.1} parent=1 // pred_region
      _
    $region13: #{tpu_custom_call.1} parent=1 // pred_fallthru
      _
    // Predicated region
    $region14: #{tpu_custom_call.1} parent=1 // pred_check
      _
    $region15: #{tpu_custom_call.1} parent=1 // pred_check_branch
      %25 = sbr.rel (0) target = $region17
    $region16: #{tpu_custom_call.1} parent=1 // pred_region
      %26 = dma.done [#allocation4], 512
    $region17: #{tpu_custom_call.1} parent=1 // pred_fallthru
      _
    %v27 = vld [vmem:[#allocation3] sm:$0xff]
    %v28 = vld [vmem:[#allocation3 + $0x8] sm:$0xff]
    %v29 = vld [vmem:[#allocation3 + $0x10] sm:$0xff]
    %v30 = vld [vmem:[#allocation3 + $0x18] sm:$0xff]
    %v35 = vcombine.high %v27, %v27
    %v36 = vcombine.high %v28, %v28
    %v37 = vcombine.high %v29, %v29
    %v38 = vcombine.high %v30, %v30
    %43 = vst [vmem:[#allocation2] sm:$0xf] %v27
    %44 = vst [vmem:[#allocation2 + $0x8] sm:$0xf] %v35
    %45 = vst [vmem:[#allocation2 + $0x10] sm:$0xf] %v28
    %46 = vst [vmem:[#allocation2 + $0x18] sm:$0xf] %v36
    %47 = vst [vmem:[#allocation2 + $0x20] sm:$0xf] %v29
    %48 = vst [vmem:[#allocation2 + $0x28] sm:$0xf] %v37
    %49 = vst [vmem:[#allocation2 + $0x30] sm:$0xf] %v30
    %50 = vst [vmem:[#allocation2 + $0x38] sm:$0xf] %v38
    %v51 = vand.u32 2147483647, %v27
    %vm52 = vcmp.le.f32.partialorder %v51, 0.7853982
    %vm53 = vcmp.lt.s32.totalorder %v27, 0
    %v54 = vand.u32 %v27, 2139095040
    %v55 = vshrl.u32 %v54, 23
    %v56 = vsub.s32 %v55, 127
    %v57 = vand.u32 2147483647, %v27
    %v58 = vand.u32 %v57, 8388607
    %v59 = vor.u32 %v58, 8388608
    %v60 = vsub.s32 0, %v59
    %v61 = vadd.s32 %v56, 1
    %vm62 = vcmp.gt.s32.totalorder %v61, 0
    %v63 = vsel %vm62, %v61, 0
    %v64 = vshrl.u32 %v63, 5
    %v65 = vand.u32 %v63, 31
    %v66 = vsub.s32 32, %v65
    %v67 = vshrl.u32 683565275, %v66
    %v68 = vshll.u32 683565275, %v65
    %v69 = vshrl.u32 2475754826, %v66
    %v70 = vor.u32 %v68, %v69
    %v71 = vshll.u32 2475754826, %v65
    %v72 = vshrl.u32 2131351028, %v66
    %v73 = vor.u32 %v71, %v72
    %v74 = vshll.u32 2131351028, %v65
    %v75 = vshrl.u32 2102212464, %v66
    %v76 = vor.u32 %v74, %v75
    %v77 = vshll.u32 2102212464, %v65
    %v78 = vshrl.u32 920167782, %v66
    %v79 = vor.u32 %v77, %v78
    %v80 = vshll.u32 920167782, %v65
    %v81 = vshrl.u32 1326507024, %v66
    %v82 = vor.u32 %v80, %v81
    %vm83 = vcmp.lt.s32.totalorder %v64, 1
    %vm84 = vcmp.lt.s32.totalorder %v64, 2
    %vm85 = vcmp.lt.s32.totalorder %v64, 3
    %vm86 = vcmp.lt.s32.totalorder %v64, 4
    %v87 = vsel %vm83, %v67, %v70
    %v88 = vsel %vm86, %v76, 2102212464
    %v89 = vsel %vm85, %v73, %v88
    %v90 = vsel %vm84, %v87, %v89
    %v91 = vsel %vm83, %v70, %v73
    %v92 = vsel %vm86, %v79, 920167782
    %v93 = vsel %vm85, %v76, %v92
    %v94 = vsel %vm84, %v91, %v93
    %v95 = vsel %vm83, %v73, %v76
    %v96 = vsel %vm86, %v82, 1326507024
    %v97 = vsel %vm85, %v79, %v96
    %v98 = vsel %vm84, %v95, %v97
    %v99 = vshll.u32 %v59, 8
    %v100 = vmul.u32.u64.compose %v99, %v98
    %v101 = vextract.low.u32 %v100
    %v102 = vextract.high.u32 %v100
    %v103 = vmul.u32.u64.compose %v99, %v94
    %v104 = vextract.low.u32 %v103
    %v105 = vextract.high.u32 %v103
    %v106 = vmul.u32 %v99, %v90
    %v107 = vadd.s32 %v102, %v104
    %vm108 = vc.u32 %v102, %v104
    %v109 = vadd.s32 %v105, 1
    %v110 = vsel %vm108, %v109, %v105
    %v111 = vadd.s32 %v106, %v110
    %v112 = vadd.s32 %v111, 536870912
    %v113 = vshrl.u32 %v112, 30
    %v114 = vshll.u32 %v113, 30
    %v115 = vsub.s32 %v111, %v114
    %vm116 = vcmp.lt.s32.totalorder %v115, 0
    %v117 = vsub.s32 0, %v115
    %v118 = vsel %vm116, %v117, %v115
    %v119 = vclz %v118
    %v120 = vsub.s32 %v119, 2
    %vm121 = vcmp.gt.s32.totalorder 0, %v120
    %v122 = vsel %vm121, 0, %v120
    %v123 = vsub.s32 32, %v122
    %v124 = vshll.u32 %v115, %v122
    %v125 = vshrl.u32 %v107, %v123
    %v126 = vor.u32 %v124, %v125
    %v127 = vsub.s32 4294967266, %v122
    %v128 = vadd.s32 %v127, 127
    %v129 = vshll.u32 %v128, 23
    %v130 = vor.u32 4788187, %v129
    %v131 = vand.u32 2147483647, %v130
    %v133 = vcvt.s32.f32 %v126
    %v134 = vmul.f32 %v133, %v131
    %v135 = vxor.u32 %v134, 2147483648
    %v136 = vsel %vm53, %v135, %v134
    %v137 = vsub.s32 4, %v113
    %v138 = vsel %vm53, %v137, %v113
    %v139 = vsel %vm52, %v27, %v136
    %v140 = vsel %vm52, 0, %v138
    %v141 = vcosq.f32.pop %v139
    %v142 = vsinq.f32.pop %v139
    %vm143 = vweird.f32 %v27
    %v144 = vadd.s32 %v140, 3
    %v145 = vand.u32 %v144, 3
    %vm146 = vcmp.lt.s32.totalorder %v145, 2
    %vm147 = vcmp.eq.s32.totalorder %v145, 0
    %v148 = vxor.u32 %v142, 2147483648
    %v149 = vsel %vm147, %v141, %v148
    %vm150 = vcmp.eq.s32.totalorder %v145, 2
    %v151 = vxor.u32 %v141, 2147483648
    %v152 = vsel %vm150, %v151, %v142
    %v153 = vsel %vm146, %v149, %v152
    %v154 = vsel %vm143, nan, %v153
    %v155 = vand.u32 2147483647, %v28
    %vm156 = vcmp.le.f32.partialorder %v155, 0.7853982
    %vm157 = vcmp.lt.s32.totalorder %v28, 0
    %v158 = vand.u32 %v28, 2139095040
    %v159 = vshrl.u32 %v158, 23
    %v160 = vsub.s32 %v159, 127
    %v161 = vand.u32 2147483647, %v28
    %v162 = vand.u32 %v161, 8388607
    %v163 = vor.u32 %v162, 8388608
    %v164 = vsub.s32 0, %v163
    %v165 = vadd.s32 %v160, 1
    %vm166 = vcmp.gt.s32.totalorder %v165, 0
    %v167 = vsel %vm166, %v165, 0
    %v168 = vshrl.u32 %v167, 5
    %v169 = vand.u32 %v167, 31
    %v170 = vsub.s32 32, %v169
    %v171 = vshrl.u32 683565275, %v170
    %v172 = vshll.u32 683565275, %v169
    %v173 = vshrl.u32 2475754826, %v170
    %v174 = vor.u32 %v172, %v173
    %v175 = vshll.u32 2475754826, %v169
    %v176 = vshrl.u32 2131351028, %v170
    %v177 = vor.u32 %v175, %v176
    %v178 = vshll.u32 2131351028, %v169
    %v179 = vshrl.u32 2102212464, %v170
    %v180 = vor.u32 %v178, %v179
    %v181 = vshll.u32 2102212464, %v169
    %v182 = vshrl.u32 920167782, %v170
    %v183 = vor.u32 %v181, %v182
    %v184 = vshll.u32 920167782, %v169
    %v185 = vshrl.u32 1326507024, %v170
    %v186 = vor.u32 %v184, %v185
    %vm187 = vcmp.lt.s32.totalorder %v168, 1
    %vm188 = vcmp.lt.s32.totalorder %v168, 2
    %vm189 = vcmp.lt.s32.totalorder %v168, 3
    %vm190 = vcmp.lt.s32.totalorder %v168, 4
    %v191 = vsel %vm187, %v171, %v174
    %v192 = vsel %vm190, %v180, 2102212464
    %v193 = vsel %vm189, %v177, %v192
    %v194 = vsel %vm188, %v191, %v193
    %v195 = vsel %vm187, %v174, %v177
    %v196 = vsel %vm190, %v183, 920167782
    %v197 = vsel %vm189, %v180, %v196
    %v198 = vsel %vm188, %v195, %v197
    %v199 = vsel %vm187, %v177, %v180
    %v200 = vsel %vm190, %v186, 1326507024
    %v201 = vsel %vm189, %v183, %v200
    %v202 = vsel %vm188, %v199, %v201
    %v203 = vshll.u32 %v163, 8
    %v204 = vmul.u32.u64.compose %v203, %v202
    %v205 = vextract.low.u32 %v204
    %v206 = vextract.high.u32 %v204
    %v207 = vmul.u32.u64.compose %v203, %v198
    %v208 = vextract.low.u32 %v207
    %v209 = vextract.high.u32 %v207
    %v210 = vmul.u32 %v203, %v194
    %v211 = vadd.s32 %v206, %v208
    %vm212 = vc.u32 %v206, %v208
    %v213 = vadd.s32 %v209, 1
    %v214 = vsel %vm212, %v213, %v209
    %v215 = vadd.s32 %v210, %v214
    %v216 = vadd.s32 %v215, 536870912
    %v217 = vshrl.u32 %v216, 30
    %v218 = vshll.u32 %v217, 30
    %v219 = vsub.s32 %v215, %v218
    %vm220 = vcmp.lt.s32.totalorder %v219, 0
    %v221 = vsub.s32 0, %v219
    %v222 = vsel %vm220, %v221, %v219
    %v223 = vclz %v222
    %v224 = vsub.s32 %v223, 2
    %vm225 = vcmp.gt.s32.totalorder 0, %v224
    %v226 = vsel %vm225, 0, %v224
    %v227 = vsub.s32 32, %v226
    %v228 = vshll.u32 %v219, %v226
    %v229 = vshrl.u32 %v211, %v227
    %v230 = vor.u32 %v228, %v229
    %v231 = vsub.s32 4294967266, %v226
    %v232 = vadd.s32 %v231, 127
    %v233 = vshll.u32 %v232, 23
    %v234 = vor.u32 4788187, %v233
    %v235 = vand.u32 2147483647, %v234
    %v237 = vcvt.s32.f32 %v230
    %v238 = vmul.f32 %v237, %v235
    %v239 = vxor.u32 %v238, 2147483648
    %v240 = vsel %vm157, %v239, %v238
    %v241 = vsub.s32 4, %v217
    %v242 = vsel %vm157, %v241, %v217
    %v243 = vsel %vm156, %v28, %v240
    %v244 = vsel %vm156, 0, %v242
    %v245 = vcosq.f32.pop %v243
    %v246 = vsinq.f32.pop %v243
    %vm247 = vweird.f32 %v28
    %v248 = vadd.s32 %v244, 3
    %v249 = vand.u32 %v248, 3
    %vm250 = vcmp.lt.s32.totalorder %v249, 2
    %vm251 = vcmp.eq.s32.totalorder %v249, 0
    %v252 = vxor.u32 %v246, 2147483648
    %v253 = vsel %vm251, %v245, %v252
    %vm254 = vcmp.eq.s32.totalorder %v249, 2
    %v255 = vxor.u32 %v245, 2147483648
    %v256 = vsel %vm254, %v255, %v246
    %v257 = vsel %vm250, %v253, %v256
    %v258 = vsel %vm247, nan, %v257
    %v259 = vand.u32 2147483647, %v29
    %vm260 = vcmp.le.f32.partialorder %v259, 0.7853982
    %vm261 = vcmp.lt.s32.totalorder %v29, 0
    %v262 = vand.u32 %v29, 2139095040
    %v263 = vshrl.u32 %v262, 23
    %v264 = vsub.s32 %v263, 127
    %v265 = vand.u32 2147483647, %v29
    %v266 = vand.u32 %v265, 8388607
    %v267 = vor.u32 %v266, 8388608
    %v268 = vsub.s32 0, %v267
    %v269 = vadd.s32 %v264, 1
    %vm270 = vcmp.gt.s32.totalorder %v269, 0
    %v271 = vsel %vm270, %v269, 0
    %v272 = vshrl.u32 %v271, 5
    %v273 = vand.u32 %v271, 31
    %v274 = vsub.s32 32, %v273
    %v275 = vshrl.u32 683565275, %v274
    %v276 = vshll.u32 683565275, %v273
    %v277 = vshrl.u32 2475754826, %v274
    %v278 = vor.u32 %v276, %v277
    %v279 = vshll.u32 2475754826, %v273
    %v280 = vshrl.u32 2131351028, %v274
    %v281 = vor.u32 %v279, %v280
    %v282 = vshll.u32 2131351028, %v273
    %v283 = vshrl.u32 2102212464, %v274
    %v284 = vor.u32 %v282, %v283
    %v285 = vshll.u32 2102212464, %v273
    %v286 = vshrl.u32 920167782, %v274
    %v287 = vor.u32 %v285, %v286
    %v288 = vshll.u32 920167782, %v273
    %v289 = vshrl.u32 1326507024, %v274
    %v290 = vor.u32 %v288, %v289
    %vm291 = vcmp.lt.s32.totalorder %v272, 1
    %vm292 = vcmp.lt.s32.totalorder %v272, 2
    %vm293 = vcmp.lt.s32.totalorder %v272, 3
    %vm294 = vcmp.lt.s32.totalorder %v272, 4
    %v295 = vsel %vm291, %v275, %v278
    %v296 = vsel %vm294, %v284, 2102212464
    %v297 = vsel %vm293, %v281, %v296
    %v298 = vsel %vm292, %v295, %v297
    %v299 = vsel %vm291, %v278, %v281
    %v300 = vsel %vm294, %v287, 920167782
    %v301 = vsel %vm293, %v284, %v300
    %v302 = vsel %vm292, %v299, %v301
    %v303 = vsel %vm291, %v281, %v284
    %v304 = vsel %vm294, %v290, 1326507024
    %v305 = vsel %vm293, %v287, %v304
    %v306 = vsel %vm292, %v303, %v305
    %v307 = vshll.u32 %v267, 8
    %v308 = vmul.u32.u64.compose %v307, %v306
    %v309 = vextract.low.u32 %v308
    %v310 = vextract.high.u32 %v308
    %v311 = vmul.u32.u64.compose %v307, %v302
    %v312 = vextract.low.u32 %v311
    %v313 = vextract.high.u32 %v311
    %v314 = vmul.u32 %v307, %v298
    %v315 = vadd.s32 %v310, %v312
    %vm316 = vc.u32 %v310, %v312
    %v317 = vadd.s32 %v313, 1
    %v318 = vsel %vm316, %v317, %v313
    %v319 = vadd.s32 %v314, %v318
    %v320 = vadd.s32 %v319, 536870912
    %v321 = vshrl.u32 %v320, 30
    %v322 = vshll.u32 %v321, 30
    %v323 = vsub.s32 %v319, %v322
    %vm324 = vcmp.lt.s32.totalorder %v323, 0
    %v325 = vsub.s32 0, %v323
    %v326 = vsel %vm324, %v325, %v323
    %v327 = vclz %v326
    %v328 = vsub.s32 %v327, 2
    %vm329 = vcmp.gt.s32.totalorder 0, %v328
    %v330 = vsel %vm329, 0, %v328
    %v331 = vsub.s32 32, %v330
    %v332 = vshll.u32 %v323, %v330
    %v333 = vshrl.u32 %v315, %v331
    %v334 = vor.u32 %v332, %v333
    %v335 = vsub.s32 4294967266, %v330
    %v336 = vadd.s32 %v335, 127
    %v337 = vshll.u32 %v336, 23
    %v338 = vor.u32 4788187, %v337
    %v339 = vand.u32 2147483647, %v338
    %v341 = vcvt.s32.f32 %v334
    %v342 = vmul.f32 %v341, %v339
    %v343 = vxor.u32 %v342, 2147483648
    %v344 = vsel %vm261, %v343, %v342
    %v345 = vsub.s32 4, %v321
    %v346 = vsel %vm261, %v345, %v321
    %v347 = vsel %vm260, %v29, %v344
    %v348 = vsel %vm260, 0, %v346
    %v349 = vcosq.f32.pop %v347
    %v350 = vsinq.f32.pop %v347
    %vm351 = vweird.f32 %v29
    %v352 = vadd.s32 %v348, 3
    %v353 = vand.u32 %v352, 3
    %vm354 = vcmp.lt.s32.totalorder %v353, 2
    %vm355 = vcmp.eq.s32.totalorder %v353, 0
    %v356 = vxor.u32 %v350, 2147483648
    %v357 = vsel %vm355, %v349, %v356
    %vm358 = vcmp.eq.s32.totalorder %v353, 2
    %v359 = vxor.u32 %v349, 2147483648
    %v360 = vsel %vm358, %v359, %v350
    %v361 = vsel %vm354, %v357, %v360
    %v362 = vsel %vm351, nan, %v361
    %v363 = vand.u32 2147483647, %v30
    %vm364 = vcmp.le.f32.partialorder %v363, 0.7853982
    %vm365 = vcmp.lt.s32.totalorder %v30, 0
    %v366 = vand.u32 %v30, 2139095040
    %v367 = vshrl.u32 %v366, 23
    %v368 = vsub.s32 %v367, 127
    %v369 = vand.u32 2147483647, %v30
    %v370 = vand.u32 %v369, 8388607
    %v371 = vor.u32 %v370, 8388608
    %v372 = vsub.s32 0, %v371
    %v373 = vadd.s32 %v368, 1
    %vm374 = vcmp.gt.s32.totalorder %v373, 0
    %v375 = vsel %vm374, %v373, 0
    %v376 = vshrl.u32 %v375, 5
    %v377 = vand.u32 %v375, 31
    %v378 = vsub.s32 32, %v377
    %v379 = vshrl.u32 683565275, %v378
    %v380 = vshll.u32 683565275, %v377
    %v381 = vshrl.u32 2475754826, %v378
    %v382 = vor.u32 %v380, %v381
    %v383 = vshll.u32 2475754826, %v377
    %v384 = vshrl.u32 2131351028, %v378
    %v385 = vor.u32 %v383, %v384
    %v386 = vshll.u32 2131351028, %v377
    %v387 = vshrl.u32 2102212464, %v378
    %v388 = vor.u32 %v386, %v387
    %v389 = vshll.u32 2102212464, %v377
    %v390 = vshrl.u32 920167782, %v378
    %v391 = vor.u32 %v389, %v390
    %v392 = vshll.u32 920167782, %v377
    %v393 = vshrl.u32 1326507024, %v378
    %v394 = vor.u32 %v392, %v393
    %vm395 = vcmp.lt.s32.totalorder %v376, 1
    %vm396 = vcmp.lt.s32.totalorder %v376, 2
    %vm397 = vcmp.lt.s32.totalorder %v376, 3
    %vm398 = vcmp.lt.s32.totalorder %v376, 4
    %v399 = vsel %vm395, %v379, %v382
    %v400 = vsel %vm398, %v388, 2102212464
    %v401 = vsel %vm397, %v385, %v400
    %v402 = vsel %vm396, %v399, %v401
    %v403 = vsel %vm395, %v382, %v385
    %v404 = vsel %vm398, %v391, 920167782
    %v405 = vsel %vm397, %v388, %v404
    %v406 = vsel %vm396, %v403, %v405
    %v407 = vsel %vm395, %v385, %v388
    %v408 = vsel %vm398, %v394, 1326507024
    %v409 = vsel %vm397, %v391, %v408
    %v410 = vsel %vm396, %v407, %v409
    %v411 = vshll.u32 %v371, 8
    %v412 = vmul.u32.u64.compose %v411, %v410
    %v413 = vextract.low.u32 %v412
    %v414 = vextract.high.u32 %v412
    %v415 = vmul.u32.u64.compose %v411, %v406
    %v416 = vextract.low.u32 %v415
    %v417 = vextract.high.u32 %v415
    %v418 = vmul.u32 %v411, %v402
    %v419 = vadd.s32 %v414, %v416
    %vm420 = vc.u32 %v414, %v416
    %v421 = vadd.s32 %v417, 1
    %v422 = vsel %vm420, %v421, %v417
    %v423 = vadd.s32 %v418, %v422
    %v424 = vadd.s32 %v423, 536870912
    %v425 = vshrl.u32 %v424, 30
    %v426 = vshll.u32 %v425, 30
    %v427 = vsub.s32 %v423, %v426
    %vm428 = vcmp.lt.s32.totalorder %v427, 0
    %v429 = vsub.s32 0, %v427
    %v430 = vsel %vm428, %v429, %v427
    %v431 = vclz %v430
    %v432 = vsub.s32 %v431, 2
    %vm433 = vcmp.gt.s32.totalorder 0, %v432
    %v434 = vsel %vm433, 0, %v432
    %v435 = vsub.s32 32, %v434
    %v436 = vshll.u32 %v427, %v434
    %v437 = vshrl.u32 %v419, %v435
    %v438 = vor.u32 %v436, %v437
    %v439 = vsub.s32 4294967266, %v434
    %v440 = vadd.s32 %v439, 127
    %v441 = vshll.u32 %v440, 23
    %v442 = vor.u32 4788187, %v441
    %v443 = vand.u32 2147483647, %v442
    %v445 = vcvt.s32.f32 %v438
    %v446 = vmul.f32 %v445, %v443
    %v447 = vxor.u32 %v446, 2147483648
    %v448 = vsel %vm365, %v447, %v446
    %v449 = vsub.s32 4, %v425
    %v450 = vsel %vm365, %v449, %v425
    %v451 = vsel %vm364, %v30, %v448
    %v452 = vsel %vm364, 0, %v450
    %v453 = vcosq.f32.pop %v451
    %v454 = vsinq.f32.pop %v451
    %vm455 = vweird.f32 %v30
    %v456 = vadd.s32 %v452, 3
    %v457 = vand.u32 %v456, 3
    %vm458 = vcmp.lt.s32.totalorder %v457, 2
    %vm459 = vcmp.eq.s32.totalorder %v457, 0
    %v460 = vxor.u32 %v454, 2147483648
    %v461 = vsel %vm459, %v453, %v460
    %vm462 = vcmp.eq.s32.totalorder %v457, 2
    %v463 = vxor.u32 %v453, 2147483648
    %v464 = vsel %vm462, %v463, %v454
    %v465 = vsel %vm458, %v461, %v464
    %v466 = vsel %vm455, nan, %v465
    %v471 = vcombine.low %v154, %v154
    %v472 = vcombine.low %v258, %v258
    %v473 = vcombine.low %v362, %v362
    %v474 = vcombine.low %v466, %v466
    %479 = vst [vmem:[#allocation2] sm:$0xf0] %v471
    %480 = vst [vmem:[#allocation2 + $0x8] sm:$0xf0] %v154
    %481 = vst [vmem:[#allocation2 + $0x10] sm:$0xf0] %v472
    %482 = vst [vmem:[#allocation2 + $0x18] sm:$0xf0] %v258
    %483 = vst [vmem:[#allocation2 + $0x20] sm:$0xf0] %v473
    %484 = vst [vmem:[#allocation2 + $0x28] sm:$0xf0] %v362
    %485 = vst [vmem:[#allocation2 + $0x30] sm:$0xf0] %v474
    %486 = vst [vmem:[#allocation2 + $0x38] sm:$0xf0] %v466
    %v487 = vand.u32 2147483647, %v27
    %vm488 = vcmp.le.f32.partialorder %v487, 0.7853982
    %vm489 = vcmp.lt.s32.totalorder %v27, 0
    %v490 = vand.u32 %v27, 2139095040
    %v491 = vshrl.u32 %v490, 23
    %v492 = vsub.s32 %v491, 127
    %v493 = vand.u32 2147483647, %v27
    %v494 = vand.u32 %v493, 8388607
    %v495 = vor.u32 %v494, 8388608
    %v496 = vsub.s32 0, %v495
    %v497 = vadd.s32 %v492, 1
    %vm498 = vcmp.gt.s32.totalorder %v497, 0
    %v499 = vsel %vm498, %v497, 0
    %v500 = vshrl.u32 %v499, 5
    %v501 = vand.u32 %v499, 31
    %v502 = vsub.s32 32, %v501
    %v503 = vshrl.u32 683565275, %v502
    %v504 = vshll.u32 683565275, %v501
    %v505 = vshrl.u32 2475754826, %v502
    %v506 = vor.u32 %v504, %v505
    %v507 = vshll.u32 2475754826, %v501
    %v508 = vshrl.u32 2131351028, %v502
    %v509 = vor.u32 %v507, %v508
    %v510 = vshll.u32 2131351028, %v501
    %v511 = vshrl.u32 2102212464, %v502
    %v512 = vor.u32 %v510, %v511
    %v513 = vshll.u32 2102212464, %v501
    %v514 = vshrl.u32 920167782, %v502
    %v515 = vor.u32 %v513, %v514
    %v516 = vshll.u32 920167782, %v501
    %v517 = vshrl.u32 1326507024, %v502
    %v518 = vor.u32 %v516, %v517
    %vm519 = vcmp.lt.s32.totalorder %v500, 1
    %vm520 = vcmp.lt.s32.totalorder %v500, 2
    %vm521 = vcmp.lt.s32.totalorder %v500, 3
    %vm522 = vcmp.lt.s32.totalorder %v500, 4
    %v523 = vsel %vm519, %v503, %v506
    %v524 = vsel %vm522, %v512, 2102212464
    %v525 = vsel %vm521, %v509, %v524
    %v526 = vsel %vm520, %v523, %v525
    %v527 = vsel %vm519, %v506, %v509
    %v528 = vsel %vm522, %v515, 920167782
    %v529 = vsel %vm521, %v512, %v528
    %v530 = vsel %vm520, %v527, %v529
    %v531 = vsel %vm519, %v509, %v512
    %v532 = vsel %vm522, %v518, 1326507024
    %v533 = vsel %vm521, %v515, %v532
    %v534 = vsel %vm520, %v531, %v533
    %v535 = vshll.u32 %v495, 8
    %v536 = vmul.u32.u64.compose %v535, %v534
    %v537 = vextract.low.u32 %v536
    %v538 = vextract.high.u32 %v536
    %v539 = vmul.u32.u64.compose %v535, %v530
    %v540 = vextract.low.u32 %v539
    %v541 = vextract.high.u32 %v539
    %v542 = vmul.u32 %v535, %v526
    %v543 = vadd.s32 %v538, %v540
    %vm544 = vc.u32 %v538, %v540
    %v545 = vadd.s32 %v541, 1
    %v546 = vsel %vm544, %v545, %v541
    %v547 = vadd.s32 %v542, %v546
    %v548 = vadd.s32 %v547, 536870912
    %v549 = vshrl.u32 %v548, 30
    %v550 = vshll.u32 %v549, 30
    %v551 = vsub.s32 %v547, %v550
    %vm552 = vcmp.lt.s32.totalorder %v551, 0
    %v553 = vsub.s32 0, %v551
    %v554 = vsel %vm552, %v553, %v551
    %v555 = vclz %v554
    %v556 = vsub.s32 %v555, 2
    %vm557 = vcmp.gt.s32.totalorder 0, %v556
    %v558 = vsel %vm557, 0, %v556
    %v559 = vsub.s32 32, %v558
    %v560 = vshll.u32 %v551, %v558
    %v561 = vshrl.u32 %v543, %v559
    %v562 = vor.u32 %v560, %v561
    %v563 = vsub.s32 4294967266, %v558
    %v564 = vadd.s32 %v563, 127
    %v565 = vshll.u32 %v564, 23
    %v566 = vor.u32 4788187, %v565
    %v567 = vand.u32 2147483647, %v566
    %v569 = vcvt.s32.f32 %v562
    %v570 = vmul.f32 %v569, %v567
    %v571 = vxor.u32 %v570, 2147483648
    %v572 = vsel %vm489, %v571, %v570
    %v573 = vsub.s32 4, %v549
    %v574 = vsel %vm489, %v573, %v549
    %v575 = vsel %vm488, %v27, %v572
    %v576 = vsel %vm488, 0, %v574
    %v577 = vcosq.f32.pop %v575
    %v578 = vsinq.f32.pop %v575
    %vm579 = vweird.f32 %v27
    %v580 = vand.u32 %v576, 3
    %vm581 = vcmp.lt.s32.totalorder %v580, 2
    %vm582 = vcmp.eq.s32.totalorder %v580, 0
    %v583 = vxor.u32 %v578, 2147483648
    %v584 = vsel %vm582, %v577, %v583
    %vm585 = vcmp.eq.s32.totalorder %v580, 2
    %v586 = vxor.u32 %v577, 2147483648
    %v587 = vsel %vm585, %v586, %v578
    %v588 = vsel %vm581, %v584, %v587
    %v589 = vsel %vm579, nan, %v588
    %v590 = vand.u32 2147483647, %v28
    %vm591 = vcmp.le.f32.partialorder %v590, 0.7853982
    %vm592 = vcmp.lt.s32.totalorder %v28, 0
    %v593 = vand.u32 %v28, 2139095040
    %v594 = vshrl.u32 %v593, 23
    %v595 = vsub.s32 %v594, 127
    %v596 = vand.u32 2147483647, %v28
    %v597 = vand.u32 %v596, 8388607
    %v598 = vor.u32 %v597, 8388608
    %v599 = vsub.s32 0, %v598
    %v600 = vadd.s32 %v595, 1
    %vm601 = vcmp.gt.s32.totalorder %v600, 0
    %v602 = vsel %vm601, %v600, 0
    %v603 = vshrl.u32 %v602, 5
    %v604 = vand.u32 %v602, 31
    %v605 = vsub.s32 32, %v604
    %v606 = vshrl.u32 683565275, %v605
    %v607 = vshll.u32 683565275, %v604
    %v608 = vshrl.u32 2475754826, %v605
    %v609 = vor.u32 %v607, %v608
    %v610 = vshll.u32 2475754826, %v604
    %v611 = vshrl.u32 2131351028, %v605
    %v612 = vor.u32 %v610, %v611
    %v613 = vshll.u32 2131351028, %v604
    %v614 = vshrl.u32 2102212464, %v605
    %v615 = vor.u32 %v613, %v614
    %v616 = vshll.u32 2102212464, %v604
    %v617 = vshrl.u32 920167782, %v605
    %v618 = vor.u32 %v616, %v617
    %v619 = vshll.u32 920167782, %v604
    %v620 = vshrl.u32 1326507024, %v605
    %v621 = vor.u32 %v619, %v620
    %vm622 = vcmp.lt.s32.totalorder %v603, 1
    %vm623 = vcmp.lt.s32.totalorder %v603, 2
    %vm624 = vcmp.lt.s32.totalorder %v603, 3
    %vm625 = vcmp.lt.s32.totalorder %v603, 4
    %v626 = vsel %vm622, %v606, %v609
    %v627 = vsel %vm625, %v615, 2102212464
    %v628 = vsel %vm624, %v612, %v627
    %v629 = vsel %vm623, %v626, %v628
    %v630 = vsel %vm622, %v609, %v612
    %v631 = vsel %vm625, %v618, 920167782
    %v632 = vsel %vm624, %v615, %v631
    %v633 = vsel %vm623, %v630, %v632
    %v634 = vsel %vm622, %v612, %v615
    %v635 = vsel %vm625, %v621, 1326507024
    %v636 = vsel %vm624, %v618, %v635
    %v637 = vsel %vm623, %v634, %v636
    %v638 = vshll.u32 %v598, 8
    %v639 = vmul.u32.u64.compose %v638, %v637
    %v640 = vextract.low.u32 %v639
    %v641 = vextract.high.u32 %v639
    %v642 = vmul.u32.u64.compose %v638, %v633
    %v643 = vextract.low.u32 %v642
    %v644 = vextract.high.u32 %v642
    %v645 = vmul.u32 %v638, %v629
    %v646 = vadd.s32 %v641, %v643
    %vm647 = vc.u32 %v641, %v643
    %v648 = vadd.s32 %v644, 1
    %v649 = vsel %vm647, %v648, %v644
    %v650 = vadd.s32 %v645, %v649
    %v651 = vadd.s32 %v650, 536870912
    %v652 = vshrl.u32 %v651, 30
    %v653 = vshll.u32 %v652, 30
    %v654 = vsub.s32 %v650, %v653
    %vm655 = vcmp.lt.s32.totalorder %v654, 0
    %v656 = vsub.s32 0, %v654
    %v657 = vsel %vm655, %v656, %v654
    %v658 = vclz %v657
    %v659 = vsub.s32 %v658, 2
    %vm660 = vcmp.gt.s32.totalorder 0, %v659
    %v661 = vsel %vm660, 0, %v659
    %v662 = vsub.s32 32, %v661
    %v663 = vshll.u32 %v654, %v661
    %v664 = vshrl.u32 %v646, %v662
    %v665 = vor.u32 %v663, %v664
    %v666 = vsub.s32 4294967266, %v661
    %v667 = vadd.s32 %v666, 127
    %v668 = vshll.u32 %v667, 23
    %v669 = vor.u32 4788187, %v668
    %v670 = vand.u32 2147483647, %v669
    %v672 = vcvt.s32.f32 %v665
    %v673 = vmul.f32 %v672, %v670
    %v674 = vxor.u32 %v673, 2147483648
    %v675 = vsel %vm592, %v674, %v673
    %v676 = vsub.s32 4, %v652
    %v677 = vsel %vm592, %v676, %v652
    %v678 = vsel %vm591, %v28, %v675
    %v679 = vsel %vm591, 0, %v677
    %v680 = vcosq.f32.pop %v678
    %v681 = vsinq.f32.pop %v678
    %vm682 = vweird.f32 %v28
    %v683 = vand.u32 %v679, 3
    %vm684 = vcmp.lt.s32.totalorder %v683, 2
    %vm685 = vcmp.eq.s32.totalorder %v683, 0
    %v686 = vxor.u32 %v681, 2147483648
    %v687 = vsel %vm685, %v680, %v686
    %vm688 = vcmp.eq.s32.totalorder %v683, 2
    %v689 = vxor.u32 %v680, 2147483648
    %v690 = vsel %vm688, %v689, %v681
    %v691 = vsel %vm684, %v687, %v690
    %v692 = vsel %vm682, nan, %v691
    %v693 = vand.u32 2147483647, %v29
    %vm694 = vcmp.le.f32.partialorder %v693, 0.7853982
    %vm695 = vcmp.lt.s32.totalorder %v29, 0
    %v696 = vand.u32 %v29, 2139095040
    %v697 = vshrl.u32 %v696, 23
    %v698 = vsub.s32 %v697, 127
    %v699 = vand.u32 2147483647, %v29
    %v700 = vand.u32 %v699, 8388607
    %v701 = vor.u32 %v700, 8388608
    %v702 = vsub.s32 0, %v701
    %v703 = vadd.s32 %v698, 1
    %vm704 = vcmp.gt.s32.totalorder %v703, 0
    %v705 = vsel %vm704, %v703, 0
    %v706 = vshrl.u32 %v705, 5
    %v707 = vand.u32 %v705, 31
    %v708 = vsub.s32 32, %v707
    %v709 = vshrl.u32 683565275, %v708
    %v710 = vshll.u32 683565275, %v707
    %v711 = vshrl.u32 2475754826, %v708
    %v712 = vor.u32 %v710, %v711
    %v713 = vshll.u32 2475754826, %v707
    %v714 = vshrl.u32 2131351028, %v708
    %v715 = vor.u32 %v713, %v714
    %v716 = vshll.u32 2131351028, %v707
    %v717 = vshrl.u32 2102212464, %v708
    %v718 = vor.u32 %v716, %v717
    %v719 = vshll.u32 2102212464, %v707
    %v720 = vshrl.u32 920167782, %v708
    %v721 = vor.u32 %v719, %v720
    %v722 = vshll.u32 920167782, %v707
    %v723 = vshrl.u32 1326507024, %v708
    %v724 = vor.u32 %v722, %v723
    %vm725 = vcmp.lt.s32.totalorder %v706, 1
    %vm726 = vcmp.lt.s32.totalorder %v706, 2
    %vm727 = vcmp.lt.s32.totalorder %v706, 3
    %vm728 = vcmp.lt.s32.totalorder %v706, 4
    %v729 = vsel %vm725, %v709, %v712
    %v730 = vsel %vm728, %v718, 2102212464
    %v731 = vsel %vm727, %v715, %v730
    %v732 = vsel %vm726, %v729, %v731
    %v733 = vsel %vm725, %v712, %v715
    %v734 = vsel %vm728, %v721, 920167782
    %v735 = vsel %vm727, %v718, %v734
    %v736 = vsel %vm726, %v733, %v735
    %v737 = vsel %vm725, %v715, %v718
    %v738 = vsel %vm728, %v724, 1326507024
    %v739 = vsel %vm727, %v721, %v738
    %v740 = vsel %vm726, %v737, %v739
    %v741 = vshll.u32 %v701, 8
    %v742 = vmul.u32.u64.compose %v741, %v740
    %v743 = vextract.low.u32 %v742
    %v744 = vextract.high.u32 %v742
    %v745 = vmul.u32.u64.compose %v741, %v736
    %v746 = vextract.low.u32 %v745
    %v747 = vextract.high.u32 %v745
    %v748 = vmul.u32 %v741, %v732
    %v749 = vadd.s32 %v744, %v746
    %vm750 = vc.u32 %v744, %v746
    %v751 = vadd.s32 %v747, 1
    %v752 = vsel %vm750, %v751, %v747
    %v753 = vadd.s32 %v748, %v752
    %v754 = vadd.s32 %v753, 536870912
    %v755 = vshrl.u32 %v754, 30
    %v756 = vshll.u32 %v755, 30
    %v757 = vsub.s32 %v753, %v756
    %vm758 = vcmp.lt.s32.totalorder %v757, 0
    %v759 = vsub.s32 0, %v757
    %v760 = vsel %vm758, %v759, %v757
    %v761 = vclz %v760
    %v762 = vsub.s32 %v761, 2
    %vm763 = vcmp.gt.s32.totalorder 0, %v762
    %v764 = vsel %vm763, 0, %v762
    %v765 = vsub.s32 32, %v764
    %v766 = vshll.u32 %v757, %v764
    %v767 = vshrl.u32 %v749, %v765
    %v768 = vor.u32 %v766, %v767
    %v769 = vsub.s32 4294967266, %v764
    %v770 = vadd.s32 %v769, 127
    %v771 = vshll.u32 %v770, 23
    %v772 = vor.u32 4788187, %v771
    %v773 = vand.u32 2147483647, %v772
    %v775 = vcvt.s32.f32 %v768
    %v776 = vmul.f32 %v775, %v773
    %v777 = vxor.u32 %v776, 2147483648
    %v778 = vsel %vm695, %v777, %v776
    %v779 = vsub.s32 4, %v755
    %v780 = vsel %vm695, %v779, %v755
    %v781 = vsel %vm694, %v29, %v778
    %v782 = vsel %vm694, 0, %v780
    %v783 = vcosq.f32.pop %v781
    %v784 = vsinq.f32.pop %v781
    %vm785 = vweird.f32 %v29
    %v786 = vand.u32 %v782, 3
    %vm787 = vcmp.lt.s32.totalorder %v786, 2
    %vm788 = vcmp.eq.s32.totalorder %v786, 0
    %v789 = vxor.u32 %v784, 2147483648
    %v790 = vsel %vm788, %v783, %v789
    %vm791 = vcmp.eq.s32.totalorder %v786, 2
    %v792 = vxor.u32 %v783, 2147483648
    %v793 = vsel %vm791, %v792, %v784
    %v794 = vsel %vm787, %v790, %v793
    %v795 = vsel %vm785, nan, %v794
    %v796 = vand.u32 2147483647, %v30
    %vm797 = vcmp.le.f32.partialorder %v796, 0.7853982
    %vm798 = vcmp.lt.s32.totalorder %v30, 0
    %v799 = vand.u32 %v30, 2139095040
    %v800 = vshrl.u32 %v799, 23
    %v801 = vsub.s32 %v800, 127
    %v802 = vand.u32 2147483647, %v30
    %v803 = vand.u32 %v802, 8388607
    %v804 = vor.u32 %v803, 8388608
    %v805 = vsub.s32 0, %v804
    %v806 = vadd.s32 %v801, 1
    %vm807 = vcmp.gt.s32.totalorder %v806, 0
    %v808 = vsel %vm807, %v806, 0
    %v809 = vshrl.u32 %v808, 5
    %v810 = vand.u32 %v808, 31
    %v811 = vsub.s32 32, %v810
    %v812 = vshrl.u32 683565275, %v811
    %v813 = vshll.u32 683565275, %v810
    %v814 = vshrl.u32 2475754826, %v811
    %v815 = vor.u32 %v813, %v814
    %v816 = vshll.u32 2475754826, %v810
    %v817 = vshrl.u32 2131351028, %v811
    %v818 = vor.u32 %v816, %v817
    %v819 = vshll.u32 2131351028, %v810
    %v820 = vshrl.u32 2102212464, %v811
    %v821 = vor.u32 %v819, %v820
    %v822 = vshll.u32 2102212464, %v810
    %v823 = vshrl.u32 920167782, %v811
    %v824 = vor.u32 %v822, %v823
    %v825 = vshll.u32 920167782, %v810
    %v826 = vshrl.u32 1326507024, %v811
    %v827 = vor.u32 %v825, %v826
    %vm828 = vcmp.lt.s32.totalorder %v809, 1
    %vm829 = vcmp.lt.s32.totalorder %v809, 2
    %vm830 = vcmp.lt.s32.totalorder %v809, 3
    %vm831 = vcmp.lt.s32.totalorder %v809, 4
    %v832 = vsel %vm828, %v812, %v815
    %v833 = vsel %vm831, %v821, 2102212464
    %v834 = vsel %vm830, %v818, %v833
    %v835 = vsel %vm829, %v832, %v834
    %v836 = vsel %vm828, %v815, %v818
    %v837 = vsel %vm831, %v824, 920167782
    %v838 = vsel %vm830, %v821, %v837
    %v839 = vsel %vm829, %v836, %v838
    %v840 = vsel %vm828, %v818, %v821
    %v841 = vsel %vm831, %v827, 1326507024
    %v842 = vsel %vm830, %v824, %v841
    %v843 = vsel %vm829, %v840, %v842
    %v844 = vshll.u32 %v804, 8
    %v845 = vmul.u32.u64.compose %v844, %v843
    %v846 = vextract.low.u32 %v845
    %v847 = vextract.high.u32 %v845
    %v848 = vmul.u32.u64.compose %v844, %v839
    %v849 = vextract.low.u32 %v848
    %v850 = vextract.high.u32 %v848
    %v851 = vmul.u32 %v844, %v835
    %v852 = vadd.s32 %v847, %v849
    %vm853 = vc.u32 %v847, %v849
    %v854 = vadd.s32 %v850, 1
    %v855 = vsel %vm853, %v854, %v850
    %v856 = vadd.s32 %v851, %v855
    %v857 = vadd.s32 %v856, 536870912
    %v858 = vshrl.u32 %v857, 30
    %v859 = vshll.u32 %v858, 30
    %v860 = vsub.s32 %v856, %v859
    %vm861 = vcmp.lt.s32.totalorder %v860, 0
    %v862 = vsub.s32 0, %v860
    %v863 = vsel %vm861, %v862, %v860
    %v864 = vclz %v863
    %v865 = vsub.s32 %v864, 2
    %vm866 = vcmp.gt.s32.totalorder 0, %v865
    %v867 = vsel %vm866, 0, %v865
    %v868 = vsub.s32 32, %v867
    %v869 = vshll.u32 %v860, %v867
    %v870 = vshrl.u32 %v852, %v868
    %v871 = vor.u32 %v869, %v870
    %v872 = vsub.s32 4294967266, %v867
    %v873 = vadd.s32 %v872, 127
    %v874 = vshll.u32 %v873, 23
    %v875 = vor.u32 4788187, %v874
    %v876 = vand.u32 2147483647, %v875
    %v878 = vcvt.s32.f32 %v871
    %v879 = vmul.f32 %v878, %v876
    %v880 = vxor.u32 %v879, 2147483648
    %v881 = vsel %vm798, %v880, %v879
    %v882 = vsub.s32 4, %v858
    %v883 = vsel %vm798, %v882, %v858
    %v884 = vsel %vm797, %v30, %v881
    %v885 = vsel %vm797, 0, %v883
    %v886 = vcosq.f32.pop %v884
    %v887 = vsinq.f32.pop %v884
    %vm888 = vweird.f32 %v30
    %v889 = vand.u32 %v885, 3
    %vm890 = vcmp.lt.s32.totalorder %v889, 2
    %vm891 = vcmp.eq.s32.totalorder %v889, 0
    %v892 = vxor.u32 %v887, 2147483648
    %v893 = vsel %vm891, %v886, %v892
    %vm894 = vcmp.eq.s32.totalorder %v889, 2
    %v895 = vxor.u32 %v886, 2147483648
    %v896 = vsel %vm894, %v895, %v887
    %v897 = vsel %vm890, %v893, %v896
    %v898 = vsel %vm888, nan, %v897
    %v903 = vcombine.high %v589, %v589
    %v904 = vcombine.high %v692, %v692
    %v905 = vcombine.high %v795, %v795
    %v906 = vcombine.high %v898, %v898
    %911 = vst [vmem:[#allocation2 + $0x40] sm:$0xf] %v589
    %912 = vst [vmem:[#allocation2 + $0x48] sm:$0xf] %v903
    %913 = vst [vmem:[#allocation2 + $0x50] sm:$0xf] %v692
    %914 = vst [vmem:[#allocation2 + $0x58] sm:$0xf] %v904
    %915 = vst [vmem:[#allocation2 + $0x60] sm:$0xf] %v795
    %916 = vst [vmem:[#allocation2 + $0x68] sm:$0xf] %v905
    %917 = vst [vmem:[#allocation2 + $0x70] sm:$0xf] %v898
    %918 = vst [vmem:[#allocation2 + $0x78] sm:$0xf] %v906
    %v919 = vlaneseq
    %v920 = vshrl.u32 %v919, 7
    %v921 = vsub.s32 0, %v920
    %v922 = vrot.slane %v27, %v921
    %v923 = vlaneseq
    %v924 = vshrl.u32 %v923, 7
    %v925 = vsub.s32 4, %v924
    %v926 = vrot.slane %v27, %v925
    %v927 = vlaneseq
    %v928 = vshrl.u32 %v927, 7
    %v929 = vsub.s32 0, %v928
    %v930 = vrot.slane %v28, %v929
    %v931 = vlaneseq
    %v932 = vshrl.u32 %v931, 7
    %v933 = vsub.s32 4, %v932
    %v934 = vrot.slane %v28, %v933
    %v935 = vlaneseq
    %v936 = vshrl.u32 %v935, 7
    %v937 = vsub.s32 0, %v936
    %v938 = vrot.slane %v29, %v937
    %v939 = vlaneseq
    %v940 = vshrl.u32 %v939, 7
    %v941 = vsub.s32 4, %v940
    %v942 = vrot.slane %v29, %v941
    %v943 = vlaneseq
    %v944 = vshrl.u32 %v943, 7
    %v945 = vsub.s32 0, %v944
    %v946 = vrot.slane %v30, %v945
    %v947 = vlaneseq
    %v948 = vshrl.u32 %v947, 7
    %v949 = vsub.s32 4, %v948
    %v950 = vrot.slane %v30, %v949
    %v959 = vlaneseq
    %v960 = vshrl.u32 %v959, 7
    %v961 = vsub.s32 0, %v960
    %v962 = vrot.slane %v922, %v961
    %v963 = vlaneseq
    %v964 = vshrl.u32 %v963, 7
    %v965 = vsub.s32 0, %v964
    %v966 = vrot.slane %v926, %v965
    %v967 = vlaneseq
    %v968 = vshrl.u32 %v967, 7
    %v969 = vsub.s32 0, %v968
    %v970 = vrot.slane %v930, %v969
    %v971 = vlaneseq
    %v972 = vshrl.u32 %v971, 7
    %v973 = vsub.s32 0, %v972
    %v974 = vrot.slane %v934, %v973
    %v975 = vlaneseq
    %v976 = vshrl.u32 %v975, 7
    %v977 = vsub.s32 0, %v976
    %v978 = vrot.slane %v938, %v977
    %v979 = vlaneseq
    %v980 = vshrl.u32 %v979, 7
    %v981 = vsub.s32 0, %v980
    %v982 = vrot.slane %v942, %v981
    %v983 = vlaneseq
    %v984 = vshrl.u32 %v983, 7
    %v985 = vsub.s32 0, %v984
    %v986 = vrot.slane %v946, %v985
    %v987 = vlaneseq
    %v988 = vshrl.u32 %v987, 7
    %v989 = vsub.s32 0, %v988
    %v990 = vrot.slane %v950, %v989
    %v991 = vmul.f32 %v962, %v27
    %v992 = vmul.f32 %v966, %v35
    %v993 = vmul.f32 %v970, %v28
    %v994 = vmul.f32 %v974, %v36
    %v995 = vmul.f32 %v978, %v29
    %v996 = vmul.f32 %v982, %v37
    %v997 = vmul.f32 %v986, %v30
    %v998 = vmul.f32 %v990, %v38
    %v1007 = vrot.slane %v991, 4
    %v1008 = vrot.slane %v992, 4
    %v1009 = vrot.slane %v993, 4
    %v1010 = vrot.slane %v994, 4
    %v1011 = vrot.slane %v995, 4
    %v1012 = vrot.slane %v996, 4
    %v1013 = vrot.slane %v997, 4
    %v1014 = vrot.slane %v998, 4
    %1023 = vst [vmem:[#allocation2 + $0x40] sm:$0xf0] %v1007
    %1024 = vst [vmem:[#allocation2 + $0x48] sm:$0xf0] %v1008
    %1025 = vst [vmem:[#allocation2 + $0x50] sm:$0xf0] %v1009
    %1026 = vst [vmem:[#allocation2 + $0x58] sm:$0xf0] %v1010
    %1027 = vst [vmem:[#allocation2 + $0x60] sm:$0xf0] %v1011
    %1028 = vst [vmem:[#allocation2 + $0x68] sm:$0xf0] %v1012
    %1029 = vst [vmem:[#allocation2 + $0x70] sm:$0xf0] %v1013
    %1030 = vst [vmem:[#allocation2 + $0x78] sm:$0xf0] %v1014
    %v1031 = vlaneseq
    %v1032 = vshrl.u32 %v1031, 7
    %v1033 = vsub.s32 1, %v1032
    %v1034 = vrot.slane %v27, %v1033
    %v1035 = vlaneseq
    %v1036 = vshrl.u32 %v1035, 7
    %v1037 = vsub.s32 5, %v1036
    %v1038 = vrot.slane %v27, %v1037
    %v1039 = vlaneseq
    %v1040 = vshrl.u32 %v1039, 7
    %v1041 = vsub.s32 1, %v1040
    %v1042 = vrot.slane %v28, %v1041
    %v1043 = vlaneseq
    %v1044 = vshrl.u32 %v1043, 7
    %v1045 = vsub.s32 5, %v1044
    %v1046 = vrot.slane %v28, %v1045
    %v1047 = vlaneseq
    %v1048 = vshrl.u32 %v1047, 7
    %v1049 = vsub.s32 1, %v1048
    %v1050 = vrot.slane %v29, %v1049
    %v1051 = vlaneseq
    %v1052 = vshrl.u32 %v1051, 7
    %v1053 = vsub.s32 5, %v1052
    %v1054 = vrot.slane %v29, %v1053
    %v1055 = vlaneseq
    %v1056 = vshrl.u32 %v1055, 7
    %v1057 = vsub.s32 1, %v1056
    %v1058 = vrot.slane %v30, %v1057
    %v1059 = vlaneseq
    %v1060 = vshrl.u32 %v1059, 7
    %v1061 = vsub.s32 5, %v1060
    %v1062 = vrot.slane %v30, %v1061
    %v1071 = vlaneseq
    %v1072 = vshrl.u32 %v1071, 7
    %v1073 = vsub.s32 1, %v1072
    %v1074 = vrot.slane %v1034, %v1073
    %v1075 = vlaneseq
    %v1076 = vshrl.u32 %v1075, 7
    %v1077 = vsub.s32 1, %v1076
    %v1078 = vrot.slane %v1038, %v1077
    %v1079 = vlaneseq
    %v1080 = vshrl.u32 %v1079, 7
    %v1081 = vsub.s32 1, %v1080
    %v1082 = vrot.slane %v1042, %v1081
    %v1083 = vlaneseq
    %v1084 = vshrl.u32 %v1083, 7
    %v1085 = vsub.s32 1, %v1084
    %v1086 = vrot.slane %v1046, %v1085
    %v1087 = vlaneseq
    %v1088 = vshrl.u32 %v1087, 7
    %v1089 = vsub.s32 1, %v1088
    %v1090 = vrot.slane %v1050, %v1089
    %v1091 = vlaneseq
    %v1092 = vshrl.u32 %v1091, 7
    %v1093 = vsub.s32 1, %v1092
    %v1094 = vrot.slane %v1054, %v1093
    %v1095 = vlaneseq
    %v1096 = vshrl.u32 %v1095, 7
    %v1097 = vsub.s32 1, %v1096
    %v1098 = vrot.slane %v1058, %v1097
    %v1099 = vlaneseq
    %v1100 = vshrl.u32 %v1099, 7
    %v1101 = vsub.s32 1, %v1100
    %v1102 = vrot.slane %v1062, %v1101
    %v1103 = vmul.f32 %v1074, %v27
    %v1104 = vmul.f32 %v1078, %v35
    %v1105 = vmul.f32 %v1082, %v28
    %v1106 = vmul.f32 %v1086, %v36
    %v1107 = vmul.f32 %v1090, %v29
    %v1108 = vmul.f32 %v1094, %v37
    %v1109 = vmul.f32 %v1098, %v30
    %v1110 = vmul.f32 %v1102, %v38
    %1111 = vst [vmem:[#allocation2 + $0x80] sm:$0xf] %v1103
    %1112 = vst [vmem:[#allocation2 + $0x88] sm:$0xf] %v1104
    %1113 = vst [vmem:[#allocation2 + $0x90] sm:$0xf] %v1105
    %1114 = vst [vmem:[#allocation2 + $0x98] sm:$0xf] %v1106
    %1115 = vst [vmem:[#allocation2 + $0xa0] sm:$0xf] %v1107
    %1116 = vst [vmem:[#allocation2 + $0xa8] sm:$0xf] %v1108
    %1117 = vst [vmem:[#allocation2 + $0xb0] sm:$0xf] %v1109
    %1118 = vst [vmem:[#allocation2 + $0xb8] sm:$0xf] %v1110
    %v1119 = vlaneseq
    %v1120 = vshrl.u32 %v1119, 7
    %v1121 = vsub.s32 2, %v1120
    %v1122 = vrot.slane %v27, %v1121
    %v1123 = vlaneseq
    %v1124 = vshrl.u32 %v1123, 7
    %v1125 = vsub.s32 6, %v1124
    %v1126 = vrot.slane %v27, %v1125
    %v1127 = vlaneseq
    %v1128 = vshrl.u32 %v1127, 7
    %v1129 = vsub.s32 2, %v1128
    %v1130 = vrot.slane %v28, %v1129
    %v1131 = vlaneseq
    %v1132 = vshrl.u32 %v1131, 7
    %v1133 = vsub.s32 6, %v1132
    %v1134 = vrot.slane %v28, %v1133
    %v1135 = vlaneseq
    %v1136 = vshrl.u32 %v1135, 7
    %v1137 = vsub.s32 2, %v1136
    %v1138 = vrot.slane %v29, %v1137
    %v1139 = vlaneseq
    %v1140 = vshrl.u32 %v1139, 7
    %v1141 = vsub.s32 6, %v1140
    %v1142 = vrot.slane %v29, %v1141
    %v1143 = vlaneseq
    %v1144 = vshrl.u32 %v1143, 7
    %v1145 = vsub.s32 2, %v1144
    %v1146 = vrot.slane %v30, %v1145
    %v1147 = vlaneseq
    %v1148 = vshrl.u32 %v1147, 7
    %v1149 = vsub.s32 6, %v1148
    %v1150 = vrot.slane %v30, %v1149
    %v1159 = vlaneseq
    %v1160 = vshrl.u32 %v1159, 7
    %v1161 = vsub.s32 2, %v1160
    %v1162 = vrot.slane %v1122, %v1161
    %v1163 = vlaneseq
    %v1164 = vshrl.u32 %v1163, 7
    %v1165 = vsub.s32 2, %v1164
    %v1166 = vrot.slane %v1126, %v1165
    %v1167 = vlaneseq
    %v1168 = vshrl.u32 %v1167, 7
    %v1169 = vsub.s32 2, %v1168
    %v1170 = vrot.slane %v1130, %v1169
    %v1171 = vlaneseq
    %v1172 = vshrl.u32 %v1171, 7
    %v1173 = vsub.s32 2, %v1172
    %v1174 = vrot.slane %v1134, %v1173
    %v1175 = vlaneseq
    %v1176 = vshrl.u32 %v1175, 7
    %v1177 = vsub.s32 2, %v1176
    %v1178 = vrot.slane %v1138, %v1177
    %v1179 = vlaneseq
    %v1180 = vshrl.u32 %v1179, 7
    %v1181 = vsub.s32 2, %v1180
    %v1182 = vrot.slane %v1142, %v1181
    %v1183 = vlaneseq
    %v1184 = vshrl.u32 %v1183, 7
    %v1185 = vsub.s32 2, %v1184
    %v1186 = vrot.slane %v1146, %v1185
    %v1187 = vlaneseq
    %v1188 = vshrl.u32 %v1187, 7
    %v1189 = vsub.s32 2, %v1188
    %v1190 = vrot.slane %v1150, %v1189
    %v1191 = vmul.f32 %v1162, %v27
    %v1192 = vmul.f32 %v1166, %v35
    %v1193 = vmul.f32 %v1170, %v28
    %v1194 = vmul.f32 %v1174, %v36
    %v1195 = vmul.f32 %v1178, %v29
    %v1196 = vmul.f32 %v1182, %v37
    %v1197 = vmul.f32 %v1186, %v30
    %v1198 = vmul.f32 %v1190, %v38
    %v1207 = vrot.slane %v1191, 4
    %v1208 = vrot.slane %v1192, 4
    %v1209 = vrot.slane %v1193, 4
    %v1210 = vrot.slane %v1194, 4
    %v1211 = vrot.slane %v1195, 4
    %v1212 = vrot.slane %v1196, 4
    %v1213 = vrot.slane %v1197, 4
    %v1214 = vrot.slane %v1198, 4
    %1223 = vst [vmem:[#allocation2 + $0x80] sm:$0xf0] %v1207
    %1224 = vst [vmem:[#allocation2 + $0x88] sm:$0xf0] %v1208
    %1225 = vst [vmem:[#allocation2 + $0x90] sm:$0xf0] %v1209
    %1226 = vst [vmem:[#allocation2 + $0x98] sm:$0xf0] %v1210
    %1227 = vst [vmem:[#allocation2 + $0xa0] sm:$0xf0] %v1211
    %1228 = vst [vmem:[#allocation2 + $0xa8] sm:$0xf0] %v1212
    %1229 = vst [vmem:[#allocation2 + $0xb0] sm:$0xf0] %v1213
    %1230 = vst [vmem:[#allocation2 + $0xb8] sm:$0xf0] %v1214
    %v1231 = vlaneseq
    %v1232 = vshrl.u32 %v1231, 7
    %v1233 = vsub.s32 3, %v1232
    %v1234 = vrot.slane %v27, %v1233
    %v1235 = vlaneseq
    %v1236 = vshrl.u32 %v1235, 7
    %v1237 = vsub.s32 7, %v1236
    %v1238 = vrot.slane %v27, %v1237
    %v1239 = vlaneseq
    %v1240 = vshrl.u32 %v1239, 7
    %v1241 = vsub.s32 3, %v1240
    %v1242 = vrot.slane %v28, %v1241
    %v1243 = vlaneseq
    %v1244 = vshrl.u32 %v1243, 7
    %v1245 = vsub.s32 7, %v1244
    %v1246 = vrot.slane %v28, %v1245
    %v1247 = vlaneseq
    %v1248 = vshrl.u32 %v1247, 7
    %v1249 = vsub.s32 3, %v1248
    %v1250 = vrot.slane %v29, %v1249
    %v1251 = vlaneseq
    %v1252 = vshrl.u32 %v1251, 7
    %v1253 = vsub.s32 7, %v1252
    %v1254 = vrot.slane %v29, %v1253
    %v1255 = vlaneseq
    %v1256 = vshrl.u32 %v1255, 7
    %v1257 = vsub.s32 3, %v1256
    %v1258 = vrot.slane %v30, %v1257
    %v1259 = vlaneseq
    %v1260 = vshrl.u32 %v1259, 7
    %v1261 = vsub.s32 7, %v1260
    %v1262 = vrot.slane %v30, %v1261
    %v1271 = vlaneseq
    %v1272 = vshrl.u32 %v1271, 7
    %v1273 = vsub.s32 3, %v1272
    %v1274 = vrot.slane %v1234, %v1273
    %v1275 = vlaneseq
    %v1276 = vshrl.u32 %v1275, 7
    %v1277 = vsub.s32 3, %v1276
    %v1278 = vrot.slane %v1238, %v1277
    %v1279 = vlaneseq
    %v1280 = vshrl.u32 %v1279, 7
    %v1281 = vsub.s32 3, %v1280
    %v1282 = vrot.slane %v1242, %v1281
    %v1283 = vlaneseq
    %v1284 = vshrl.u32 %v1283, 7
    %v1285 = vsub.s32 3, %v1284
    %v1286 = vrot.slane %v1246, %v1285
    %v1287 = vlaneseq
    %v1288 = vshrl.u32 %v1287, 7
    %v1289 = vsub.s32 3, %v1288
    %v1290 = vrot.slane %v1250, %v1289
    %v1291 = vlaneseq
    %v1292 = vshrl.u32 %v1291, 7
    %v1293 = vsub.s32 3, %v1292
    %v1294 = vrot.slane %v1254, %v1293
    %v1295 = vlaneseq
    %v1296 = vshrl.u32 %v1295, 7
    %v1297 = vsub.s32 3, %v1296
    %v1298 = vrot.slane %v1258, %v1297
    %v1299 = vlaneseq
    %v1300 = vshrl.u32 %v1299, 7
    %v1301 = vsub.s32 3, %v1300
    %v1302 = vrot.slane %v1262, %v1301
    %v1303 = vmul.f32 %v1274, %v27
    %v1304 = vmul.f32 %v1278, %v35
    %v1305 = vmul.f32 %v1282, %v28
    %v1306 = vmul.f32 %v1286, %v36
    %v1307 = vmul.f32 %v1290, %v29
    %v1308 = vmul.f32 %v1294, %v37
    %v1309 = vmul.f32 %v1298, %v30
    %v1310 = vmul.f32 %v1302, %v38
    %1311 = vst [vmem:[#allocation2 + $0xc0] sm:$0xf] %v1303
    %1312 = vst [vmem:[#allocation2 + $0xc8] sm:$0xf] %v1304
    %1313 = vst [vmem:[#allocation2 + $0xd0] sm:$0xf] %v1305
    %1314 = vst [vmem:[#allocation2 + $0xd8] sm:$0xf] %v1306
    %1315 = vst [vmem:[#allocation2 + $0xe0] sm:$0xf] %v1307
    %1316 = vst [vmem:[#allocation2 + $0xe8] sm:$0xf] %v1308
    %1317 = vst [vmem:[#allocation2 + $0xf0] sm:$0xf] %v1309
    %1318 = vst [vmem:[#allocation2 + $0xf8] sm:$0xf] %v1310
    %1319 = vst [vmem:[#allocation2 + $0xc0] sm:$0xf0] 0.0
    %1320 = vst [vmem:[#allocation2 + $0xc8] sm:$0xf0] 0.0
    %1321 = vst [vmem:[#allocation2 + $0xd0] sm:$0xf0] 0.0
    %1322 = vst [vmem:[#allocation2 + $0xd8] sm:$0xf0] 0.0
    %1323 = vst [vmem:[#allocation2 + $0xe0] sm:$0xf0] 0.0
    %1324 = vst [vmem:[#allocation2 + $0xe8] sm:$0xf0] 0.0
    %1325 = vst [vmem:[#allocation2 + $0xf0] sm:$0xf0] 0.0
    %1326 = vst [vmem:[#allocation2 + $0xf8] sm:$0xf0] 0.0
    %v1327 = vld [vmem:[%s1] sm:$0x7]
    %v1328 = vld [vmem:[#allocation2] sm:$0xff]
    %v1329 = vld [vmem:[#allocation2 + $0x8] sm:$0xff]
    %v1330 = vld [vmem:[#allocation2 + $0x10] sm:$0xff]
    %v1331 = vld [vmem:[#allocation2 + $0x18] sm:$0xff]
    %v1332 = vld [vmem:[#allocation2 + $0x20] sm:$0xff]
    %v1333 = vld [vmem:[#allocation2 + $0x28] sm:$0xff]
    %v1334 = vld [vmem:[#allocation2 + $0x30] sm:$0xff]
    %v1335 = vld [vmem:[#allocation2 + $0x38] sm:$0xff]
    %v1336 = vld [vmem:[#allocation2 + $0x40] sm:$0xff]
    %v1337 = vld [vmem:[#allocation2 + $0x48] sm:$0xff]
    %v1338 = vld [vmem:[#allocation2 + $0x50] sm:$0xff]
    %v1339 = vld [vmem:[#allocation2 + $0x58] sm:$0xff]
    %v1340 = vld [vmem:[#allocation2 + $0x60] sm:$0xff]
    %v1341 = vld [vmem:[#allocation2 + $0x68] sm:$0xff]
    %v1342 = vld [vmem:[#allocation2 + $0x70] sm:$0xff]
    %v1343 = vld [vmem:[#allocation2 + $0x78] sm:$0xff]
    %v1344 = vld [vmem:[#allocation2 + $0x80] sm:$0xff]
    %v1345 = vld [vmem:[#allocation2 + $0x88] sm:$0xff]
    %v1346 = vld [vmem:[#allocation2 + $0x90] sm:$0xff]
    %v1347 = vld [vmem:[#allocation2 + $0x98] sm:$0xff]
    %v1348 = vld [vmem:[#allocation2 + $0xa0] sm:$0xff]
    %v1349 = vld [vmem:[#allocation2 + $0xa8] sm:$0xff]
    %v1350 = vld [vmem:[#allocation2 + $0xb0] sm:$0xff]
    %v1351 = vld [vmem:[#allocation2 + $0xb8] sm:$0xff]
    %v1352 = vld [vmem:[#allocation2 + $0xc0] sm:$0xff]
    %v1353 = vld [vmem:[#allocation2 + $0xc8] sm:$0xff]
    %v1354 = vld [vmem:[#allocation2 + $0xd0] sm:$0xff]
    %v1355 = vld [vmem:[#allocation2 + $0xd8] sm:$0xff]
    %v1356 = vld [vmem:[#allocation2 + $0xe0] sm:$0xff]
    %v1357 = vld [vmem:[#allocation2 + $0xe8] sm:$0xff]
    %v1358 = vld [vmem:[#allocation2 + $0xf0] sm:$0xff]
    %v1359 = vld [vmem:[#allocation2 + $0xf8] sm:$0xff]
    %v1360 = vld [vmem:[%s2] sm:$0x7]
    %1362 = vset.pattern.permute.xlu0 0
    %1363 = vperm.xlu0 %1362, %v1360
    %v1364 = vpop.permute.xlu0 %1363
    %vm1366 = vcmask 261120
    %v1368 = vsel %vm1366, %v1327, 0
    %1370 = vmatprep.subr.mxu0 %v1329
    %1371 = vmatpush1.msra.mxu0 %v1328
    %1372 = vmatprep.subr.mxu0 %v1337
    %1373 = vmatpush1.msra.mxu0 %v1336
    %1374 = vmatprep.subr.mxu0 %v1345
    %1375 = vmatpush1.msra.mxu0 %v1344
    %1376 = vmatprep.subr.mxu0 %v1353
    %1377 = vmatpush1.msra.mxu0 %v1352
    %1378 = vmatprep.subr.mxu0 0.0
    %1379 = vmatpush1.msra.mxu0 0.0
    %1380 = vmatprep.subr.mxu0 0.0
    %1381 = vmatpush1.msra.mxu0 0.0
    %1382 = vmatprep.subr.mxu0 0.0
    %1383 = vmatpush1.msra.mxu0 0.0
    %1384 = vmatprep.subr.mxu0 0.0
    %1385 = vmatpush1.msra.mxu0 0.0
    %1386 = vmatprep.subr.mxu0 0.0
    %1387 = vmatpush1.msra.mxu0 0.0
    %1388 = vmatprep.subr.mxu0 0.0
    %1389 = vmatpush1.msra.mxu0 0.0
    %1390 = vmatprep.subr.mxu0 0.0
    %1391 = vmatpush1.msra.mxu0 0.0
    %1392 = vmatprep.subr.mxu0 0.0
    %1393 = vmatpush1.msra.mxu0 0.0
    %1394 = vmatprep.subr.mxu0 0.0
    %1395 = vmatpush1.msra.mxu0 0.0
    %1396 = vmatprep.subr.mxu0 0.0
    %1397 = vmatpush1.msra.mxu0 0.0
    %1398 = vmatprep.subr.mxu0 0.0
    %1399 = vmatpush1.msra.mxu0 0.0
    %1400 = vmatprep.subr.mxu0 0.0
    %1401 = vmatpush1.msra.mxu0 0.0
    %1402 = vmatprep.subr.mxu0 0.0
    %1403 = vmatpush1.msra.mxu0 0.0
    %1404 = vmatprep.subr.mxu0 0.0
    %1405 = vmatpush1.msra.mxu0 0.0
    %1406 = vmatprep.subr.mxu0 0.0
    %1407 = vmatpush1.msra.mxu0 0.0
    %1408 = vmatprep.subr.mxu0 0.0
    %1409 = vmatpush1.msra.mxu0 0.0
    %1410 = vmatprep.subr.mxu0 0.0
    %1411 = vmatpush1.msra.mxu0 0.0
    %1412 = vmatprep.subr.mxu0 0.0
    %1413 = vmatpush1.msra.mxu0 0.0
    %1414 = vmatprep.subr.mxu0 0.0
    %1415 = vmatpush1.msra.mxu0 0.0
    %1416 = vmatprep.subr.mxu0 0.0
    %1417 = vmatpush1.msra.mxu0 0.0
    %1418 = vmatprep.subr.mxu0 0.0
    %1419 = vmatpush1.msra.mxu0 0.0
    %1420 = vmatprep.subr.mxu0 0.0
    %1421 = vmatpush1.msra.mxu0 0.0
    %1422 = vmatprep.subr.mxu0 0.0
    %1423 = vmatpush1.msra.mxu0 0.0
    %1424 = vmatprep.subr.mxu0 0.0
    %1425 = vmatpush1.msra.mxu0 0.0
    %1426 = vmatprep.subr.mxu0 0.0
    %1427 = vmatpush1.msra.mxu0 0.0
    %1428 = vmatprep.subr.mxu0 0.0
    %1429 = vmatpush1.msra.mxu0 0.0
    %1430 = vmatprep.subr.mxu0 0.0
    %1431 = vmatpush1.msra.mxu0 0.0
    %1432 = vmatprep.subr.mxu0 0.0
    %1433 = vmatpush1.msra.mxu0 0.0
    %1434 = vmatprep.mubr.f32.mxu0 0.0
    %1435 = vmatmul.mubr.f32.gmra.mrb[0].mxu0 %v1368
    %v1436 = vpop.f32.mrb[0].mxu0
    %v1437 = vadd.f32 %v1364, %v1436
    %v1438 = vpop.f32.mrb[0].mxu0
    %v1439 = vadd.f32 %v1364, %v1438
    %1440 = vdwg.mxu0
    %1441 = vmatprep.subr.mxu0 %v1331
    %1442 = vmatpush1.msra.mxu0 %v1330
    %1443 = vmatprep.subr.mxu0 %v1339
    %1444 = vmatpush1.msra.mxu0 %v1338
    %1445 = vmatprep.subr.mxu0 %v1347
    %1446 = vmatpush1.msra.mxu0 %v1346
    %1447 = vmatprep.subr.mxu0 %v1355
    %1448 = vmatpush1.msra.mxu0 %v1354
    %1449 = vmatprep.subr.mxu0 0.0
    %1450 = vmatpush1.msra.mxu0 0.0
    %1451 = vmatprep.subr.mxu0 0.0
    %1452 = vmatpush1.msra.mxu0 0.0
    %1453 = vmatprep.subr.mxu0 0.0
    %1454 = vmatpush1.msra.mxu0 0.0
    %1455 = vmatprep.subr.mxu0 0.0
    %1456 = vmatpush1.msra.mxu0 0.0
    %1457 = vmatprep.subr.mxu0 0.0
    %1458 = vmatpush1.msra.mxu0 0.0
    %1459 = vmatprep.subr.mxu0 0.0
    %1460 = vmatpush1.msra.mxu0 0.0
    %1461 = vmatprep.subr.mxu0 0.0
    %1462 = vmatpush1.msra.mxu0 0.0
    %1463 = vmatprep.subr.mxu0 0.0
    %1464 = vmatpush1.msra.mxu0 0.0
    %1465 = vmatprep.subr.mxu0 0.0
    %1466 = vmatpush1.msra.mxu0 0.0
    %1467 = vmatprep.subr.mxu0 0.0
    %1468 = vmatpush1.msra.mxu0 0.0
    %1469 = vmatprep.subr.mxu0 0.0
    %1470 = vmatpush1.msra.mxu0 0.0
    %1471 = vmatprep.subr.mxu0 0.0
    %1472 = vmatpush1.msra.mxu0 0.0
    %1473 = vmatprep.subr.mxu0 0.0
    %1474 = vmatpush1.msra.mxu0 0.0
    %1475 = vmatprep.subr.mxu0 0.0
    %1476 = vmatpush1.msra.mxu0 0.0
    %1477 = vmatprep.subr.mxu0 0.0
    %1478 = vmatpush1.msra.mxu0 0.0
    %1479 = vmatprep.subr.mxu0 0.0
    %1480 = vmatpush1.msra.mxu0 0.0
    %1481 = vmatprep.subr.mxu0 0.0
    %1482 = vmatpush1.msra.mxu0 0.0
    %1483 = vmatprep.subr.mxu0 0.0
    %1484 = vmatpush1.msra.mxu0 0.0
    %1485 = vmatprep.subr.mxu0 0.0
    %1486 = vmatpush1.msra.mxu0 0.0
    %1487 = vmatprep.subr.mxu0 0.0
    %1488 = vmatpush1.msra.mxu0 0.0
    %1489 = vmatprep.subr.mxu0 0.0
    %1490 = vmatpush1.msra.mxu0 0.0
    %1491 = vmatprep.subr.mxu0 0.0
    %1492 = vmatpush1.msra.mxu0 0.0
    %1493 = vmatprep.subr.mxu0 0.0
    %1494 = vmatpush1.msra.mxu0 0.0
    %1495 = vmatprep.subr.mxu0 0.0
    %1496 = vmatpush1.msra.mxu0 0.0
    %1497 = vmatprep.subr.mxu0 0.0
    %1498 = vmatpush1.msra.mxu0 0.0
    %1499 = vmatprep.subr.mxu0 0.0
    %1500 = vmatpush1.msra.mxu0 0.0
    %1501 = vmatprep.subr.mxu0 0.0
    %1502 = vmatpush1.msra.mxu0 0.0
    %1503 = vmatprep.subr.mxu0 0.0
    %1504 = vmatpush1.msra.mxu0 0.0
    %1505 = vmatprep.mubr.f32.mxu0 0.0
    %1506 = vmatmul.mubr.f32.gmra.mrb[0].mxu0 %v1368
    %v1507 = vpop.f32.mrb[0].mxu0
    %v1508 = vadd.f32 %v1364, %v1507
    %v1509 = vpop.f32.mrb[0].mxu0
    %v1510 = vadd.f32 %v1364, %v1509
    %1511 = vdwg.mxu0
    %1512 = vmatprep.subr.mxu0 %v1333
    %1513 = vmatpush1.msra.mxu0 %v1332
    %1514 = vmatprep.subr.mxu0 %v1341
    %1515 = vmatpush1.msra.mxu0 %v1340
    %1516 = vmatprep.subr.mxu0 %v1349
    %1517 = vmatpush1.msra.mxu0 %v1348
    %1518 = vmatprep.subr.mxu0 %v1357
    %1519 = vmatpush1.msra.mxu0 %v1356
    %1520 = vmatprep.subr.mxu0 0.0
    %1521 = vmatpush1.msra.mxu0 0.0
    %1522 = vmatprep.subr.mxu0 0.0
    %1523 = vmatpush1.msra.mxu0 0.0
    %1524 = vmatprep.subr.mxu0 0.0
    %1525 = vmatpush1.msra.mxu0 0.0
    %1526 = vmatprep.subr.mxu0 0.0
    %1527 = vmatpush1.msra.mxu0 0.0
    %1528 = vmatprep.subr.mxu0 0.0
    %1529 = vmatpush1.msra.mxu0 0.0
    %1530 = vmatprep.subr.mxu0 0.0
    %1531 = vmatpush1.msra.mxu0 0.0
    %1532 = vmatprep.subr.mxu0 0.0
    %1533 = vmatpush1.msra.mxu0 0.0
    %1534 = vmatprep.subr.mxu0 0.0
    %1535 = vmatpush1.msra.mxu0 0.0
    %1536 = vmatprep.subr.mxu0 0.0
    %1537 = vmatpush1.msra.mxu0 0.0
    %1538 = vmatprep.subr.mxu0 0.0
    %1539 = vmatpush1.msra.mxu0 0.0
    %1540 = vmatprep.subr.mxu0 0.0
    %1541 = vmatpush1.msra.mxu0 0.0
    %1542 = vmatprep.subr.mxu0 0.0
    %1543 = vmatpush1.msra.mxu0 0.0
    %1544 = vmatprep.subr.mxu0 0.0
    %1545 = vmatpush1.msra.mxu0 0.0
    %1546 = vmatprep.subr.mxu0 0.0
    %1547 = vmatpush1.msra.mxu0 0.0
    %1548 = vmatprep.subr.mxu0 0.0
    %1549 = vmatpush1.msra.mxu0 0.0
    %1550 = vmatprep.subr.mxu0 0.0
    %1551 = vmatpush1.msra.mxu0 0.0
    %1552 = vmatprep.subr.mxu0 0.0
    %1553 = vmatpush1.msra.mxu0 0.0
    %1554 = vmatprep.subr.mxu0 0.0
    %1555 = vmatpush1.msra.mxu0 0.0
    %1556 = vmatprep.subr.mxu0 0.0
    %1557 = vmatpush1.msra.mxu0 0.0
    %1558 = vmatprep.subr.mxu0 0.0
    %1559 = vmatpush1.msra.mxu0 0.0
    %1560 = vmatprep.subr.mxu0 0.0
    %1561 = vmatpush1.msra.mxu0 0.0
    %1562 = vmatprep.subr.mxu0 0.0
    %1563 = vmatpush1.msra.mxu0 0.0
    %1564 = vmatprep.subr.mxu0 0.0
    %1565 = vmatpush1.msra.mxu0 0.0
    %1566 = vmatprep.subr.mxu0 0.0
    %1567 = vmatpush1.msra.mxu0 0.0
    %1568 = vmatprep.subr.mxu0 0.0
    %1569 = vmatpush1.msra.mxu0 0.0
    %1570 = vmatprep.subr.mxu0 0.0
    %1571 = vmatpush1.msra.mxu0 0.0
    %1572 = vmatprep.subr.mxu0 0.0
    %1573 = vmatpush1.msra.mxu0 0.0
    %1574 = vmatprep.subr.mxu0 0.0
    %1575 = vmatpush1.msra.mxu0 0.0
    %1576 = vmatprep.mubr.f32.mxu0 0.0
    %1577 = vmatmul.mubr.f32.gmra.mrb[0].mxu0 %v1368
    %v1578 = vpop.f32.mrb[0].mxu0
    %v1579 = vadd.f32 %v1364, %v1578
    %v1580 = vpop.f32.mrb[0].mxu0
    %v1581 = vadd.f32 %v1364, %v1580
    %1582 = vdwg.mxu0
    %1583 = vmatprep.subr.mxu0 %v1335
    %1584 = vmatpush1.msra.mxu0 %v1334
    %1585 = vmatprep.subr.mxu0 %v1343
    %1586 = vmatpush1.msra.mxu0 %v1342
    %1587 = vmatprep.subr.mxu0 %v1351
    %1588 = vmatpush1.msra.mxu0 %v1350
    %1589 = vmatprep.subr.mxu0 %v1359
    %1590 = vmatpush1.msra.mxu0 %v1358
    %1591 = vmatprep.subr.mxu0 0.0
    %1592 = vmatpush1.msra.mxu0 0.0
    %1593 = vmatprep.subr.mxu0 0.0
    %1594 = vmatpush1.msra.mxu0 0.0
    %1595 = vmatprep.subr.mxu0 0.0
    %1596 = vmatpush1.msra.mxu0 0.0
    %1597 = vmatprep.subr.mxu0 0.0
    %1598 = vmatpush1.msra.mxu0 0.0
    %1599 = vmatprep.subr.mxu0 0.0
    %1600 = vmatpush1.msra.mxu0 0.0
    %1601 = vmatprep.subr.mxu0 0.0
    %1602 = vmatpush1.msra.mxu0 0.0
    %1603 = vmatprep.subr.mxu0 0.0
    %1604 = vmatpush1.msra.mxu0 0.0
    %1605 = vmatprep.subr.mxu0 0.0
    %1606 = vmatpush1.msra.mxu0 0.0
    %1607 = vmatprep.subr.mxu0 0.0
    %1608 = vmatpush1.msra.mxu0 0.0
    %1609 = vmatprep.subr.mxu0 0.0
    %1610 = vmatpush1.msra.mxu0 0.0
    %1611 = vmatprep.subr.mxu0 0.0
    %1612 = vmatpush1.msra.mxu0 0.0
    %1613 = vmatprep.subr.mxu0 0.0
    %1614 = vmatpush1.msra.mxu0 0.0
    %1615 = vmatprep.subr.mxu0 0.0
    %1616 = vmatpush1.msra.mxu0 0.0
    %1617 = vmatprep.subr.mxu0 0.0
    %1618 = vmatpush1.msra.mxu0 0.0
    %1619 = vmatprep.subr.mxu0 0.0
    %1620 = vmatpush1.msra.mxu0 0.0
    %1621 = vmatprep.subr.mxu0 0.0
    %1622 = vmatpush1.msra.mxu0 0.0
    %1623 = vmatprep.subr.mxu0 0.0
    %1624 = vmatpush1.msra.mxu0 0.0
    %1625 = vmatprep.subr.mxu0 0.0
    %1626 = vmatpush1.msra.mxu0 0.0
    %1627 = vmatprep.subr.mxu0 0.0
    %1628 = vmatpush1.msra.mxu0 0.0
    %1629 = vmatprep.subr.mxu0 0.0
    %1630 = vmatpush1.msra.mxu0 0.0
    %1631 = vmatprep.subr.mxu0 0.0
    %1632 = vmatpush1.msra.mxu0 0.0
    %1633 = vmatprep.subr.mxu0 0.0
    %1634 = vmatpush1.msra.mxu0 0.0
    %1635 = vmatprep.subr.mxu0 0.0
    %1636 = vmatpush1.msra.mxu0 0.0
    %1637 = vmatprep.subr.mxu0 0.0
    %1638 = vmatpush1.msra.mxu0 0.0
    %1639 = vmatprep.subr.mxu0 0.0
    %1640 = vmatpush1.msra.mxu0 0.0
    %1641 = vmatprep.subr.mxu0 0.0
    %1642 = vmatpush1.msra.mxu0 0.0
    %1643 = vmatprep.subr.mxu0 0.0
    %1644 = vmatpush1.msra.mxu0 0.0
    %1645 = vmatprep.subr.mxu0 0.0
    %1646 = vmatpush1.msra.mxu0 0.0
    %1647 = vmatprep.mubr.f32.mxu0 0.0
    %1648 = vmatmul.mubr.f32.gmra.mrb[0].mxu0 %v1368
    %v1649 = vpop.f32.mrb[0].mxu0
    %v1650 = vadd.f32 %v1364, %v1649
    %v1651 = vpop.f32.mrb[0].mxu0
    %v1652 = vadd.f32 %v1364, %v1651
    %1653 = vdwg.mxu0
    %v1662 = vcombine.low %v1437, %v1439
    %v1663 = vcombine.low %v1508, %v1510
    %v1664 = vcombine.low %v1579, %v1581
    %v1665 = vcombine.low %v1650, %v1652
    %1670 = vst [vmem:[#allocation6] sm:$0x77] %v1662
    %1671 = vst [vmem:[#allocation6 + $0x8] sm:$0x77] %v1663
    %1672 = vst [vmem:[#allocation6 + $0x10] sm:$0x77] %v1664
    %1673 = vst [vmem:[#allocation6 + $0x18] sm:$0x77] %v1665
    // Predicated region
    $region18: #{tpu_custom_call.1} parent=1 // pred_check
      _
    $region19: #{tpu_custom_call.1} parent=1 // pred_check_branch
      %1675 = sbr.rel (0) target = $region21
    $region20: #{tpu_custom_call.1} parent=1 // pred_region
      %s1677 = ssub.s32 512, 512
      %1678 = vsyncadd [#allocation5], %s1677
      %s1680 = sshll.u32 [#allocation6], 4
      %s1681 = int_to_ptr.vmem [resolvable:$true] %s1680
      %1683 = dma.vmem_to_hbm [thread:$0]  %s1681, 512, %s3, [#allocation5]
    $region21: #{tpu_custom_call.1} parent=1 // pred_fallthru
      _
    // Predicated region
    $region22: #{tpu_custom_call.1} parent=1 // pred_check
      _
    $region23: #{tpu_custom_call.1} parent=1 // pred_check_branch
      %1685 = sbr.rel (0) target = $region25
    $region24: #{tpu_custom_call.1} parent=1 // pred_region
      %1686 = dma.done [#allocation5], 512
    $region25: #{tpu_custom_call.1} parent=1 // pred_fallthru
      _
    %1687 = vsyncpa [#allocation4], 1
    %1688 = vsyncpa [#allocation5], 1

</llo_original>
